<compile_context>
chip_gen: v5e
topology: v5e:2x2
jax: 0.10.0
libtpu: 0.0.40
codegen_flags: <defaults>
</compile_context>

<pallas_src>
import math
import functools

import jax
import jax.numpy as jnp
from jax.experimental import pallas as pl
from jax.experimental.pallas import tpu as pltpu


# ----------------------------------------------------------------------------- fused kernel

def fused_transformer_kernel(x_ref, pe_ref,
                             wqkv_ref, bqkv_ref, wo_ref, bo_ref,
                             g1_ref, be1_ref, w1_ref, b1_ref, w2_ref, b2_ref,
                             g2_ref, be2_ref, fg_ref, fb_ref,
                             out_ref, act_ref, *, nhead, head_dim):
    """grid = (batch, layer). Processes one whole (S, D) sequence per batch element.

    act_ref is a VMEM-resident f32 activation carried across the layer axis.
    """
    l = pl.program_id(1)
    n_layers = pl.num_programs(1)

    # ---- layer 0: load input + positional embedding into the resident activation ----
    @pl.when(l == 0)
    def _():
        act_ref[...] = x_ref[0].astype(jnp.float32) + pe_ref[...]

    x = act_ref[...]                                           # (S, D) f32
    D = x.shape[-1]

    # ---- fused Q/K/V projection (scale already folded into the Q columns) ----
    qkv = jnp.dot(x, wqkv_ref[0], preferred_element_type=jnp.float32) + bqkv_ref[0]  # (S, 3D)

    # ---- multi-head self attention (static unroll over heads; nhead is small) ----
    heads = []
    for h in range(nhead):
        lo = h * head_dim
        hi = lo + head_dim
        q = qkv[:, lo:hi]                                      # (S, hd), pre-scaled
        k = qkv[:, D + lo:D + hi]
        v = qkv[:, 2 * D + lo:2 * D + hi]
        s = jnp.dot(q, k.T, preferred_element_type=jnp.float32)   # (S, S)
        s = s - jnp.max(s, axis=-1, keepdims=True)
        p = jnp.exp(s)
        p = p * pl.reciprocal(jnp.sum(p, axis=-1, keepdims=True), approx=False)
        heads.append(jnp.dot(p, v, preferred_element_type=jnp.float32))
    attn = jnp.concatenate(heads, axis=-1)                     # (S, D)
    attn = jnp.dot(attn, wo_ref[0], preferred_element_type=jnp.float32) + bo_ref[0]

    # ---- residual + LayerNorm 1 (post-norm) ----
    y = x + attn
    mu = jnp.mean(y, axis=-1, keepdims=True)
    var = jnp.mean((y - mu) ** 2, axis=-1, keepdims=True)
    y = (y - mu) * jax.lax.rsqrt(var + 1e-5) * g1_ref[0] + be1_ref[0]

    # ---- feed-forward (relu) ----
    h1 = jnp.maximum(
        jnp.dot(y, w1_ref[0], preferred_element_type=jnp.float32) + b1_ref[0], 0.0)
    ff = jnp.dot(h1, w2_ref[0], preferred_element_type=jnp.float32) + b2_ref[0]

    # ---- residual + LayerNorm 2 ----
    z = y + ff
    mu2 = jnp.mean(z, axis=-1, keepdims=True)
    var2 = jnp.mean((z - mu2) ** 2, axis=-1, keepdims=True)
    z = (z - mu2) * jax.lax.rsqrt(var2 + 1e-5) * g2_ref[0] + be2_ref[0]

    act_ref[...] = z

    # ---- last layer: final LayerNorm of the encoder stack, write back ----
    @pl.when(l == n_layers - 1)
    def _():
        w = act_ref[...]
        mu3 = jnp.mean(w, axis=-1, keepdims=True)
        var3 = jnp.mean((w - mu3) ** 2, axis=-1, keepdims=True)
        o = (w - mu3) * jax.lax.rsqrt(var3 + 1e-5) * fg_ref[...] + fb_ref[...]
        out_ref[0] = o.astype(out_ref.dtype)


# ----------------------------------------------------------------------------- wrapper

def pack_params(params, S, nhead):
    """Host-side layout prep: pre-transpose weights, fuse QKV, fold 1/sqrt(hd) into Q,
    and stack per-layer parameters along a leading layer axis."""
    D = params["layers"][0]["wq"].shape[0]
    hd = D // nhead
    scale = 1.0 / math.sqrt(hd)

    def stack(fn):
        return jnp.stack([fn(p) for p in params["layers"]])

    return {
        "pe": params["pe"][:S],                                               # (S, D)
        "wqkv": stack(lambda p: jnp.concatenate(
            [p["wq"].T * scale, p["wk"].T, p["wv"].T], axis=1)),              # (L, D, 3D)
        "bqkv": stack(lambda p: jnp.concatenate(
            [p["bq"] * scale, p["bk"], p["bv"]], axis=1)),                    # (L, 1, 3D)
        "wo": stack(lambda p: p["wo"].T),                                     # (L, D, D)
        "bo": stack(lambda p: p["bo"]),                                       # (L, 1, D)
        "g1": stack(lambda p: p["g1"]),
        "be1": stack(lambda p: p["be1"]),
        "w1": stack(lambda p: p["w1"].T),                                     # (L, D, H)
        "b1": stack(lambda p: p["b1"]),                                       # (L, 1, H)
        "w2": stack(lambda p: p["w2"].T),                                     # (L, H, D)
        "b2": stack(lambda p: p["b2"]),
        "g2": stack(lambda p: p["g2"]),
        "be2": stack(lambda p: p["be2"]),
        "fg": params["final_g"],                                              # (1, D)
        "fb": params["final_b"],                                              # (1, D)
    }


def transformer_forward(x_sbd, params, nhead):
    """x_sbd: (S, B, D) — same convention as PyTorch batch_first=False."""
    S, B, D = x_sbd.shape
    L = len(params["layers"])
    H = params["layers"][0]["w1"].shape[0]
    head_dim = D // nhead

    kp = pack_params(params, S, nhead)
    x = jnp.transpose(x_sbd, (1, 0, 2))                        # (B, S, D), tiny layout op

    layer_map = lambda b, l: (l, 0, 0)
    full2_map = lambda b, l: (0, 0)
    batch_map = lambda b, l: (b, 0, 0)

    in_specs = [
        pl.BlockSpec((1, S, D), batch_map),        # x
        pl.BlockSpec((S, D), full2_map),           # pe
        pl.BlockSpec((1, D, 3 * D), layer_map),    # wqkv (pre-transposed, Q pre-scaled)
        pl.BlockSpec((1, 1, 3 * D), layer_map),    # bqkv
        pl.BlockSpec((1, D, D), layer_map),        # wo (pre-transposed)
        pl.BlockSpec((1, 1, D), layer_map),        # bo
        pl.BlockSpec((1, 1, D), layer_map),        # g1
        pl.BlockSpec((1, 1, D), layer_map),        # be1
        pl.BlockSpec((1, D, H), layer_map),        # w1 (pre-transposed)
        pl.BlockSpec((1, 1, H), layer_map),        # b1
        pl.BlockSpec((1, H, D), layer_map),        # w2 (pre-transposed)
        pl.BlockSpec((1, 1, D), layer_map),        # b2
        pl.BlockSpec((1, 1, D), layer_map),        # g2
        pl.BlockSpec((1, 1, D), layer_map),        # be2
        pl.BlockSpec((1, D), full2_map),           # final gamma
        pl.BlockSpec((1, D), full2_map),           # final beta
    ]

    out = pl.pallas_call(
        functools.partial(fused_transformer_kernel, nhead=nhead, head_dim=head_dim),
        out_shape=jax.ShapeDtypeStruct((B, S, D), x.dtype),
        grid=(B, L),
        in_specs=in_specs,
        out_specs=pl.BlockSpec((1, S, D), batch_map),
        scratch_shapes=[pltpu.VMEM((S, D), jnp.float32)],
        compiler_params=pltpu.CompilerParams(
            dimension_semantics=("parallel", "arbitrary")),
    )(x, kp["pe"], kp["wqkv"], kp["bqkv"], kp["wo"], kp["bo"],
      kp["g1"], kp["be1"], kp["w1"], kp["b1"], kp["w2"], kp["b2"],
      kp["g2"], kp["be2"], kp["fg"], kp["fb"])

    out = jnp.transpose(out, (1, 0, 2))                        # back to (S, B, D)
    return jnp.squeeze(out)                                    # mimics .squeeze()


# ----------------------------------------------------------------------------- params

def make_positional_embeddings(d_model, max_len=100):
    position = jnp.arange(max_len, dtype=jnp.float32)[:, None]
    div_term = jnp.exp(jnp.arange(0, d_model, 2, dtype=jnp.float32)
                       * (-math.log(10000.0) / d_model))
    pe = jnp.zeros((max_len, d_model), dtype=jnp.float32)
    pe = pe.at[:, 0::2].set(jnp.sin(position * div_term))
    pe = pe.at[:, 1::2].set(jnp.cos(position * div_term))
    return pe                                                  # (max_len, d_model)


def init_params(key, D, H, num_layers):
    layers = []
    for _ in range(num_layers):
        key, k1, k2, k3, k4, k5, k6 = jax.random.split(key, 7)
        layers.append({
            "wq": 0.05 * jax.random.normal(k1, (D, D), jnp.float32),
            "wk": 0.05 * jax.random.normal(k2, (D, D), jnp.float32),
            "wv": 0.05 * jax.random.normal(k3, (D, D), jnp.float32),
            "bq": jnp.zeros((1, D), jnp.float32),
            "bk": jnp.zeros((1, D), jnp.float32),
            "bv": jnp.zeros((1, D), jnp.float32),
            "wo": 0.05 * jax.random.normal(k4, (D, D), jnp.float32),
            "bo": jnp.zeros((1, D), jnp.float32),
            "g1": jnp.ones((1, D), jnp.float32),
            "be1": jnp.zeros((1, D), jnp.float32),
            "w1": 0.05 * jax.random.normal(k5, (H, D), jnp.float32),   # linear1.weight
            "b1": jnp.zeros((1, H), jnp.float32),
            "w2": 0.05 * jax.random.normal(k6, (D, H), jnp.float32),   # linear2.weight
            "b2": jnp.zeros((1, D), jnp.float32),
            "g2": jnp.ones((1, D), jnp.float32),
            "be2": jnp.zeros((1, D), jnp.float32),
        })
    return {
        "pe": make_positional_embeddings(D),
        "layers": layers,
        "final_g": jnp.ones((1, D), jnp.float32),
        "final_b": jnp.zeros((1, D), jnp.float32),
    }


# ----------------------------------------------------------------------------- reference

def _ln(x, g, b):
    mu = jnp.mean(x, -1, keepdims=True)
    var = jnp.mean((x - mu) ** 2, -1, keepdims=True)
    return (x - mu) / jnp.sqrt(var + 1e-5) * g + b


def ref_forward(x_sbd, params, nhead):
    S, B, D = x_sbd.shape
    hd = D // nhead
    x = jnp.transpose(x_sbd, (1, 0, 2)) + params["pe"][:S][None]
    for p in params["layers"]:
        q = x @ p["wq"].T + p["bq"]
        k = x @ p["wk"].T + p["bk"]
        v = x @ p["wv"].T + p["bv"]
        qh = q.reshape(B, S, nhead, hd).transpose(0, 2, 1, 3)
        kh = k.reshape(B, S, nhead, hd).transpose(0, 2, 1, 3)
        vh = v.reshape(B, S, nhead, hd).transpose(0, 2, 1, 3)
        s = qh @ kh.transpose(0, 1, 3, 2) / math.sqrt(hd)
        a = jax.nn.softmax(s, axis=-1)
        o = (a @ vh).transpose(0, 2, 1, 3).reshape(B, S, D)
        o = o @ p["wo"].T + p["bo"]
        y = _ln(x + o, p["g1"], p["be1"])
        ff = jnp.maximum(y @ p["w1"].T + p["b1"], 0.0) @ p["w2"].T + p["b2"]
        x = _ln(y + ff, p["g2"], p["be2"])
    x = _ln(x, params["final_g"], params["final_b"])
    return jnp.squeeze(jnp.transpose(x, (1, 0, 2)))


# ----------------------------------------------------------------------------- main

if __name__ == "__main__":
    S, B, D = 8, 2, 32           # seq, batch, input_dim
    NHEAD, H, LAYERS = 4, 64, 2  # nhead, linear_hidden, num_layers (small)

    key = jax.random.PRNGKey(0)
    key, kx = jax.random.split(key)
    x = jax.random.normal(kx, (S, B, D), jnp.float32)        # PyTorch (S, B, D) layout
    params = init_params(key, D, H, LAYERS)

    out = transformer_forward(x, params, NHEAD)
    out = jax.block_until_ready(out)

    ref = ref_forward(x, params, NHEAD)
    assert out.shape == ref.shape
    assert jnp.allclose(out, ref, atol=2e-4, rtol=2e-4), "mismatch vs. JAX reference"

    print("KERNEL_OK")
</pallas_src>

<mosaic_0001>
module attributes {stable_mosaic.version = 11 : i64} {
  func.func @fused_transformer_kernel(%arg0: i32, %arg1: i32, %arg2: memref<1x8x32xf32, #tpu.memory_space<vmem>>, %arg3: memref<8x32xf32, #tpu.memory_space<vmem>>, %arg4: memref<1x32x96xf32, #tpu.memory_space<vmem>>, %arg5: memref<1x1x96xf32, #tpu.memory_space<vmem>>, %arg6: memref<1x32x32xf32, #tpu.memory_space<vmem>>, %arg7: memref<1x1x32xf32, #tpu.memory_space<vmem>>, %arg8: memref<1x1x32xf32, #tpu.memory_space<vmem>>, %arg9: memref<1x1x32xf32, #tpu.memory_space<vmem>>, %arg10: memref<1x32x64xf32, #tpu.memory_space<vmem>>, %arg11: memref<1x1x64xf32, #tpu.memory_space<vmem>>, %arg12: memref<1x64x32xf32, #tpu.memory_space<vmem>>, %arg13: memref<1x1x32xf32, #tpu.memory_space<vmem>>, %arg14: memref<1x1x32xf32, #tpu.memory_space<vmem>>, %arg15: memref<1x1x32xf32, #tpu.memory_space<vmem>>, %arg16: memref<1x32xf32, #tpu.memory_space<vmem>>, %arg17: memref<1x32xf32, #tpu.memory_space<vmem>>, %arg18: memref<1x8x32xf32, #tpu.memory_space<vmem>>, %arg19: memref<8x32xf32, #tpu.memory_space<vmem>>) attributes {dimension_semantics = [#tpu.dimension_semantics<parallel>, #tpu.dimension_semantics<arbitrary>], iteration_bounds = array<i64: 2, 2>, scalar_prefetch = 0 : i64, scratch_operands = 1 : i64, tpu.core_type = #tpu.core_type<tc>, window_params = [{transform_indices = @transform_0, window_bounds = array<i64: 1, 8, 32>}, {pipeline_mode = #tpu.pipeline_mode<synchronous>, transform_indices = @transform_1, window_bounds = array<i64: 8, 32>}, {transform_indices = @transform_2, window_bounds = array<i64: 1, 32, 96>}, {transform_indices = @transform_3, window_bounds = array<i64: 1, 1, 96>}, {transform_indices = @transform_4, window_bounds = array<i64: 1, 32, 32>}, {transform_indices = @transform_5, window_bounds = array<i64: 1, 1, 32>}, {transform_indices = @transform_6, window_bounds = array<i64: 1, 1, 32>}, {transform_indices = @transform_7, window_bounds = array<i64: 1, 1, 32>}, {transform_indices = @transform_8, window_bounds = array<i64: 1, 32, 64>}, {transform_indices = @transform_9, window_bounds = array<i64: 1, 1, 64>}, {transform_indices = @transform_10, window_bounds = array<i64: 1, 64, 32>}, {transform_indices = @transform_11, window_bounds = array<i64: 1, 1, 32>}, {transform_indices = @transform_12, window_bounds = array<i64: 1, 1, 32>}, {transform_indices = @transform_13, window_bounds = array<i64: 1, 1, 32>}, {pipeline_mode = #tpu.pipeline_mode<synchronous>, transform_indices = @transform_14, window_bounds = array<i64: 1, 32>}, {pipeline_mode = #tpu.pipeline_mode<synchronous>, transform_indices = @transform_15, window_bounds = array<i64: 1, 32>}, {transform_indices = @transform_16, window_bounds = array<i64: 1, 8, 32>}]} {
    %c0_i32 = arith.constant 0 : i32
    %0 = arith.cmpi eq, %arg1, %c0_i32 : i32
    %1 = arith.extui %0 : i1 to i32
    %c0_i32_0 = arith.constant 0 : i32
    %2 = arith.cmpi ne, %1, %c0_i32_0 : i32
    scf.if %2 {
      %c0_71 = arith.constant 0 : index
      %c0_72 = arith.constant 0 : index
      %c0_73 = arith.constant 0 : index
      %157 = vector.load %arg2[%c0_71, %c0_72, %c0_73] : memref<1x8x32xf32, #tpu.memory_space<vmem>>, vector<1x8x32xf32>
      %158 = vector.shape_cast %157 : vector<1x8x32xf32> to vector<8x32xf32>
      %c0_74 = arith.constant 0 : index
      %c0_75 = arith.constant 0 : index
      %159 = vector.load %arg3[%c0_74, %c0_75] : memref<8x32xf32, #tpu.memory_space<vmem>>, vector<8x32xf32>
      %160 = arith.addf %158, %159 : vector<8x32xf32>
      %c0_76 = arith.constant 0 : index
      %c0_77 = arith.constant 0 : index
      %161 = vector.load %arg19[%c0_76, %c0_77] : memref<8x32xf32, #tpu.memory_space<vmem>>, vector<8x32xf32>
      tpu.vector_store %arg19[%c0_76, %c0_77], %160 {strides = array<i32>} : memref<8x32xf32, #tpu.memory_space<vmem>>, vector<8x32xf32>,
    } else {
    }
    %c0 = arith.constant 0 : index
    %c0_1 = arith.constant 0 : index
    %3 = vector.load %arg19[%c0, %c0_1] : memref<8x32xf32, #tpu.memory_space<vmem>>, vector<8x32xf32>
    %c0_2 = arith.constant 0 : index
    %c0_3 = arith.constant 0 : index
    %c0_4 = arith.constant 0 : index
    %4 = vector.load %arg4[%c0_2, %c0_3, %c0_4] : memref<1x32x96xf32, #tpu.memory_space<vmem>>, vector<1x32x96xf32>
    %5 = vector.shape_cast %4 : vector<1x32x96xf32> to vector<32x96xf32>
    %cst = arith.constant dense<0.000000e+00> : vector<8x96xf32>
    %6 = tpu.matmul %3, %5, %cst {dimension_numbers = #tpu.dot_dimension_numbers<[1], [0], [0], [1], [0, 0, 1, 1], [], []>} : vector<8x32xf32>, vector<32x96xf32>, vector<8x96xf32> -> vector<8x96xf32>
    %c0_5 = arith.constant 0 : index
    %c0_6 = arith.constant 0 : index
    %c0_7 = arith.constant 0 : index
    %7 = vector.load %arg5[%c0_5, %c0_6, %c0_7] : memref<1x1x96xf32, #tpu.memory_space<vmem>>, vector<1x1x96xf32>
    %8 = vector.shape_cast %7 : vector<1x1x96xf32> to vector<1x96xf32>
    %9 = vector.broadcast %8 : vector<1x96xf32> to vector<8x96xf32>
    %10 = arith.addf %6, %9 : vector<8x96xf32>
    %11 = vector.extract_strided_slice %10 {offsets = [0, 0], sizes = [8, 8], strides = [1, 1]} : vector<8x96xf32> to vector<8x8xf32>
    %12 = vector.extract_strided_slice %10 {offsets = [0, 32], sizes = [8, 8], strides = [1, 1]} : vector<8x96xf32> to vector<8x8xf32>
    %13 = vector.extract_strided_slice %10 {offsets = [0, 64], sizes = [8, 8], strides = [1, 1]} : vector<8x96xf32> to vector<8x8xf32>
    %14 = tpu.transpose %12, [1, 0] : vector<8x8xf32> -> vector<8x8xf32>
    %cst_8 = arith.constant dense<0.000000e+00> : vector<8x8xf32>
    %15 = tpu.matmul %11, %14, %cst_8 {dimension_numbers = #tpu.dot_dimension_numbers<[1], [0], [0], [1], [0, 0, 1, 1], [], []>} : vector<8x8xf32>, vector<8x8xf32>, vector<8x8xf32> -> vector<8x8xf32>
    %cst_9 = arith.constant dense<0xFF800000> : vector<8xf32>
    %16 = vector.multi_reduction <maximumf>, %15, %cst_9 [1] : vector<8x8xf32> to vector<8xf32>
    %17 = vector.shape_cast %16 : vector<8xf32> to vector<8x1xf32>
    %18 = vector.broadcast %17 : vector<8x1xf32> to vector<8x8xf32>
    %19 = arith.subf %15, %18 : vector<8x8xf32>
    %20 = math.exp %19 : vector<8x8xf32>
    %cst_10 = arith.constant dense<0.000000e+00> : vector<8xf32>
    %21 = vector.multi_reduction <add>, %20, %cst_10 [1] : vector<8x8xf32> to vector<8xf32>
    %22 = vector.shape_cast %21 : vector<8xf32> to vector<8x1xf32>
    %23 = tpu.reciprocal %22 : vector<8x1xf32> -> vector<8x1xf32>
    %24 = vector.broadcast %23 : vector<8x1xf32> to vector<8x8xf32>
    %25 = arith.mulf %20, %24 : vector<8x8xf32>
    %cst_11 = arith.constant dense<0.000000e+00> : vector<8x8xf32>
    %26 = tpu.matmul %25, %13, %cst_11 {dimension_numbers = #tpu.dot_dimension_numbers<[1], [0], [0], [1], [0, 0, 1, 1], [], []>} : vector<8x8xf32>, vector<8x8xf32>, vector<8x8xf32> -> vector<8x8xf32>
    %27 = vector.extract_strided_slice %10 {offsets = [0, 8], sizes = [8, 8], strides = [1, 1]} : vector<8x96xf32> to vector<8x8xf32>
    %28 = vector.extract_strided_slice %10 {offsets = [0, 40], sizes = [8, 8], strides = [1, 1]} : vector<8x96xf32> to vector<8x8xf32>
    %29 = vector.extract_strided_slice %10 {offsets = [0, 72], sizes = [8, 8], strides = [1, 1]} : vector<8x96xf32> to vector<8x8xf32>
    %30 = tpu.transpose %28, [1, 0] : vector<8x8xf32> -> vector<8x8xf32>
    %cst_12 = arith.constant dense<0.000000e+00> : vector<8x8xf32>
    %31 = tpu.matmul %27, %30, %cst_12 {dimension_numbers = #tpu.dot_dimension_numbers<[1], [0], [0], [1], [0, 0, 1, 1], [], []>} : vector<8x8xf32>, vector<8x8xf32>, vector<8x8xf32> -> vector<8x8xf32>
    %cst_13 = arith.constant dense<0xFF800000> : vector<8xf32>
    %32 = vector.multi_reduction <maximumf>, %31, %cst_13 [1] : vector<8x8xf32> to vector<8xf32>
    %33 = vector.shape_cast %32 : vector<8xf32> to vector<8x1xf32>
    %34 = vector.broadcast %33 : vector<8x1xf32> to vector<8x8xf32>
    %35 = arith.subf %31, %34 : vector<8x8xf32>
    %36 = math.exp %35 : vector<8x8xf32>
    %cst_14 = arith.constant dense<0.000000e+00> : vector<8xf32>
    %37 = vector.multi_reduction <add>, %36, %cst_14 [1] : vector<8x8xf32> to vector<8xf32>
    %38 = vector.shape_cast %37 : vector<8xf32> to vector<8x1xf32>
    %39 = tpu.reciprocal %38 : vector<8x1xf32> -> vector<8x1xf32>
    %40 = vector.broadcast %39 : vector<8x1xf32> to vector<8x8xf32>
    %41 = arith.mulf %36, %40 : vector<8x8xf32>
    %cst_15 = arith.constant dense<0.000000e+00> : vector<8x8xf32>
    %42 = tpu.matmul %41, %29, %cst_15 {dimension_numbers = #tpu.dot_dimension_numbers<[1], [0], [0], [1], [0, 0, 1, 1], [], []>} : vector<8x8xf32>, vector<8x8xf32>, vector<8x8xf32> -> vector<8x8xf32>
    %43 = vector.extract_strided_slice %10 {offsets = [0, 16], sizes = [8, 8], strides = [1, 1]} : vector<8x96xf32> to vector<8x8xf32>
    %44 = vector.extract_strided_slice %10 {offsets = [0, 48], sizes = [8, 8], strides = [1, 1]} : vector<8x96xf32> to vector<8x8xf32>
    %45 = vector.extract_strided_slice %10 {offsets = [0, 80], sizes = [8, 8], strides = [1, 1]} : vector<8x96xf32> to vector<8x8xf32>
    %46 = tpu.transpose %44, [1, 0] : vector<8x8xf32> -> vector<8x8xf32>
    %cst_16 = arith.constant dense<0.000000e+00> : vector<8x8xf32>
    %47 = tpu.matmul %43, %46, %cst_16 {dimension_numbers = #tpu.dot_dimension_numbers<[1], [0], [0], [1], [0, 0, 1, 1], [], []>} : vector<8x8xf32>, vector<8x8xf32>, vector<8x8xf32> -> vector<8x8xf32>
    %cst_17 = arith.constant dense<0xFF800000> : vector<8xf32>
    %48 = vector.multi_reduction <maximumf>, %47, %cst_17 [1] : vector<8x8xf32> to vector<8xf32>
    %49 = vector.shape_cast %48 : vector<8xf32> to vector<8x1xf32>
    %50 = vector.broadcast %49 : vector<8x1xf32> to vector<8x8xf32>
    %51 = arith.subf %47, %50 : vector<8x8xf32>
    %52 = math.exp %51 : vector<8x8xf32>
    %cst_18 = arith.constant dense<0.000000e+00> : vector<8xf32>
    %53 = vector.multi_reduction <add>, %52, %cst_18 [1] : vector<8x8xf32> to vector<8xf32>
    %54 = vector.shape_cast %53 : vector<8xf32> to vector<8x1xf32>
    %55 = tpu.reciprocal %54 : vector<8x1xf32> -> vector<8x1xf32>
    %56 = vector.broadcast %55 : vector<8x1xf32> to vector<8x8xf32>
    %57 = arith.mulf %52, %56 : vector<8x8xf32>
    %cst_19 = arith.constant dense<0.000000e+00> : vector<8x8xf32>
    %58 = tpu.matmul %57, %45, %cst_19 {dimension_numbers = #tpu.dot_dimension_numbers<[1], [0], [0], [1], [0, 0, 1, 1], [], []>} : vector<8x8xf32>, vector<8x8xf32>, vector<8x8xf32> -> vector<8x8xf32>
    %59 = vector.extract_strided_slice %10 {offsets = [0, 24], sizes = [8, 8], strides = [1, 1]} : vector<8x96xf32> to vector<8x8xf32>
    %60 = vector.extract_strided_slice %10 {offsets = [0, 56], sizes = [8, 8], strides = [1, 1]} : vector<8x96xf32> to vector<8x8xf32>
    %61 = vector.extract_strided_slice %10 {offsets = [0, 88], sizes = [8, 8], strides = [1, 1]} : vector<8x96xf32> to vector<8x8xf32>
    %62 = tpu.transpose %60, [1, 0] : vector<8x8xf32> -> vector<8x8xf32>
    %cst_20 = arith.constant dense<0.000000e+00> : vector<8x8xf32>
    %63 = tpu.matmul %59, %62, %cst_20 {dimension_numbers = #tpu.dot_dimension_numbers<[1], [0], [0], [1], [0, 0, 1, 1], [], []>} : vector<8x8xf32>, vector<8x8xf32>, vector<8x8xf32> -> vector<8x8xf32>
    %cst_21 = arith.constant dense<0xFF800000> : vector<8xf32>
    %64 = vector.multi_reduction <maximumf>, %63, %cst_21 [1] : vector<8x8xf32> to vector<8xf32>
    %65 = vector.shape_cast %64 : vector<8xf32> to vector<8x1xf32>
    %66 = vector.broadcast %65 : vector<8x1xf32> to vector<8x8xf32>
    %67 = arith.subf %63, %66 : vector<8x8xf32>
    %68 = math.exp %67 : vector<8x8xf32>
    %cst_22 = arith.constant dense<0.000000e+00> : vector<8xf32>
    %69 = vector.multi_reduction <add>, %68, %cst_22 [1] : vector<8x8xf32> to vector<8xf32>
    %70 = vector.shape_cast %69 : vector<8xf32> to vector<8x1xf32>
    %71 = tpu.reciprocal %70 : vector<8x1xf32> -> vector<8x1xf32>
    %72 = vector.broadcast %71 : vector<8x1xf32> to vector<8x8xf32>
    %73 = arith.mulf %68, %72 : vector<8x8xf32>
    %cst_23 = arith.constant dense<0.000000e+00> : vector<8x8xf32>
    %74 = tpu.matmul %73, %61, %cst_23 {dimension_numbers = #tpu.dot_dimension_numbers<[1], [0], [0], [1], [0, 0, 1, 1], [], []>} : vector<8x8xf32>, vector<8x8xf32>, vector<8x8xf32> -> vector<8x8xf32>
    %75 = tpu.concatenate %26, %42, %58, %74 in 1 : vector<8x8xf32>, vector<8x8xf32>, vector<8x8xf32>, vector<8x8xf32> -> vector<8x32xf32>
    %c0_24 = arith.constant 0 : index
    %c0_25 = arith.constant 0 : index
    %c0_26 = arith.constant 0 : index
    %76 = vector.load %arg6[%c0_24, %c0_25, %c0_26] : memref<1x32x32xf32, #tpu.memory_space<vmem>>, vector<1x32x32xf32>
    %77 = vector.shape_cast %76 : vector<1x32x32xf32> to vector<32x32xf32>
    %cst_27 = arith.constant dense<0.000000e+00> : vector<8x32xf32>
    %78 = tpu.matmul %75, %77, %cst_27 {dimension_numbers = #tpu.dot_dimension_numbers<[1], [0], [0], [1], [0, 0, 1, 1], [], []>} : vector<8x32xf32>, vector<32x32xf32>, vector<8x32xf32> -> vector<8x32xf32>
    %c0_28 = arith.constant 0 : index
    %c0_29 = arith.constant 0 : index
    %c0_30 = arith.constant 0 : index
    %79 = vector.load %arg7[%c0_28, %c0_29, %c0_30] : memref<1x1x32xf32, #tpu.memory_space<vmem>>, vector<1x1x32xf32>
    %80 = vector.shape_cast %79 : vector<1x1x32xf32> to vector<1x32xf32>
    %81 = vector.broadcast %80 : vector<1x32xf32> to vector<8x32xf32>
    %82 = arith.addf %78, %81 : vector<8x32xf32>
    %83 = arith.addf %3, %82 : vector<8x32xf32>
    %cst_31 = arith.constant dense<0.000000e+00> : vector<8xf32>
    %84 = vector.multi_reduction <add>, %83, %cst_31 [1] : vector<8x32xf32> to vector<8xf32>
    %85 = vector.shape_cast %84 : vector<8xf32> to vector<8x1xf32>
    %cst_32 = arith.constant 3.200000e+01 : f32
    %86 = vector.broadcast %cst_32 : f32 to vector<8x1xf32>
    %87 = arith.divf %85, %86 : vector<8x1xf32>
    %88 = vector.broadcast %87 : vector<8x1xf32> to vector<8x32xf32>
    %89 = arith.subf %83, %88 : vector<8x32xf32>
    %90 = arith.mulf %89, %89 : vector<8x32xf32>
    %cst_33 = arith.constant dense<0.000000e+00> : vector<8xf32>
    %91 = vector.multi_reduction <add>, %90, %cst_33 [1] : vector<8x32xf32> to vector<8xf32>
    %92 = vector.shape_cast %91 : vector<8xf32> to vector<8x1xf32>
    %cst_34 = arith.constant 3.200000e+01 : f32
    %93 = vector.broadcast %cst_34 : f32 to vector<8x1xf32>
    %94 = arith.divf %92, %93 : vector<8x1xf32>
    %95 = vector.broadcast %87 : vector<8x1xf32> to vector<8x32xf32>
    %96 = arith.subf %83, %95 : vector<8x32xf32>
    %cst_35 = arith.constant 9.99999974E-6 : f32
    %97 = vector.broadcast %cst_35 : f32 to vector<8x1xf32>
    %98 = arith.addf %94, %97 : vector<8x1xf32>
    %99 = math.rsqrt %98 : vector<8x1xf32>
    %100 = vector.broadcast %99 : vector<8x1xf32> to vector<8x32xf32>
    %101 = arith.mulf %96, %100 : vector<8x32xf32>
    %c0_36 = arith.constant 0 : index
    %c0_37 = arith.constant 0 : index
    %c0_38 = arith.constant 0 : index
    %102 = vector.load %arg8[%c0_36, %c0_37, %c0_38] : memref<1x1x32xf32, #tpu.memory_space<vmem>>, vector<1x1x32xf32>
    %103 = vector.shape_cast %102 : vector<1x1x32xf32> to vector<1x32xf32>
    %104 = vector.broadcast %103 : vector<1x32xf32> to vector<8x32xf32>
    %105 = arith.mulf %101, %104 : vector<8x32xf32>
    %c0_39 = arith.constant 0 : index
    %c0_40 = arith.constant 0 : index
    %c0_41 = arith.constant 0 : index
    %106 = vector.load %arg9[%c0_39, %c0_40, %c0_41] : memref<1x1x32xf32, #tpu.memory_space<vmem>>, vector<1x1x32xf32>
    %107 = vector.shape_cast %106 : vector<1x1x32xf32> to vector<1x32xf32>
    %108 = vector.broadcast %107 : vector<1x32xf32> to vector<8x32xf32>
    %109 = arith.addf %105, %108 : vector<8x32xf32>
    %c0_42 = arith.constant 0 : index
    %c0_43 = arith.constant 0 : index
    %c0_44 = arith.constant 0 : index
    %110 = vector.load %arg10[%c0_42, %c0_43, %c0_44] : memref<1x32x64xf32, #tpu.memory_space<vmem>>, vector<1x32x64xf32>
    %111 = vector.shape_cast %110 : vector<1x32x64xf32> to vector<32x64xf32>
    %cst_45 = arith.constant dense<0.000000e+00> : vector<8x64xf32>
    %112 = tpu.matmul %109, %111, %cst_45 {dimension_numbers = #tpu.dot_dimension_numbers<[1], [0], [0], [1], [0, 0, 1, 1], [], []>} : vector<8x32xf32>, vector<32x64xf32>, vector<8x64xf32> -> vector<8x64xf32>
    %c0_46 = arith.constant 0 : index
    %c0_47 = arith.constant 0 : index
    %c0_48 = arith.constant 0 : index
    %113 = vector.load %arg11[%c0_46, %c0_47, %c0_48] : memref<1x1x64xf32, #tpu.memory_space<vmem>>, vector<1x1x64xf32>
    %114 = vector.shape_cast %113 : vector<1x1x64xf32> to vector<1x64xf32>
    %115 = vector.broadcast %114 : vector<1x64xf32> to vector<8x64xf32>
    %116 = arith.addf %112, %115 : vector<8x64xf32>
    %cst_49 = arith.constant 0.000000e+00 : f32
    %117 = vector.broadcast %cst_49 : f32 to vector<8x64xf32>
    %118 = arith.maximumf %116, %117 : vector<8x64xf32>
    %c0_50 = arith.constant 0 : index
    %c0_51 = arith.constant 0 : index
    %c0_52 = arith.constant 0 : index
    %119 = vector.load %arg12[%c0_50, %c0_51, %c0_52] : memref<1x64x32xf32, #tpu.memory_space<vmem>>, vector<1x64x32xf32>
    %120 = vector.shape_cast %119 : vector<1x64x32xf32> to vector<64x32xf32>
    %cst_53 = arith.constant dense<0.000000e+00> : vector<8x32xf32>
    %121 = tpu.matmul %118, %120, %cst_53 {dimension_numbers = #tpu.dot_dimension_numbers<[1], [0], [0], [1], [0, 0, 1, 1], [], []>} : vector<8x64xf32>, vector<64x32xf32>, vector<8x32xf32> -> vector<8x32xf32>
    %c0_54 = arith.constant 0 : index
    %c0_55 = arith.constant 0 : index
    %c0_56 = arith.constant 0 : index
    %122 = vector.load %arg13[%c0_54, %c0_55, %c0_56] : memref<1x1x32xf32, #tpu.memory_space<vmem>>, vector<1x1x32xf32>
    %123 = vector.shape_cast %122 : vector<1x1x32xf32> to vector<1x32xf32>
    %124 = vector.broadcast %123 : vector<1x32xf32> to vector<8x32xf32>
    %125 = arith.addf %121, %124 : vector<8x32xf32>
    %126 = arith.addf %109, %125 : vector<8x32xf32>
    %cst_57 = arith.constant dense<0.000000e+00> : vector<8xf32>
    %127 = vector.multi_reduction <add>, %126, %cst_57 [1] : vector<8x32xf32> to vector<8xf32>
    %128 = vector.shape_cast %127 : vector<8xf32> to vector<8x1xf32>
    %cst_58 = arith.constant 3.200000e+01 : f32
    %129 = vector.broadcast %cst_58 : f32 to vector<8x1xf32>
    %130 = arith.divf %128, %129 : vector<8x1xf32>
    %131 = vector.broadcast %130 : vector<8x1xf32> to vector<8x32xf32>
    %132 = arith.subf %126, %131 : vector<8x32xf32>
    %133 = arith.mulf %132, %132 : vector<8x32xf32>
    %cst_59 = arith.constant dense<0.000000e+00> : vector<8xf32>
    %134 = vector.multi_reduction <add>, %133, %cst_59 [1] : vector<8x32xf32> to vector<8xf32>
    %135 = vector.shape_cast %134 : vector<8xf32> to vector<8x1xf32>
    %cst_60 = arith.constant 3.200000e+01 : f32
    %136 = vector.broadcast %cst_60 : f32 to vector<8x1xf32>
    %137 = arith.divf %135, %136 : vector<8x1xf32>
    %138 = vector.broadcast %130 : vector<8x1xf32> to vector<8x32xf32>
    %139 = arith.subf %126, %138 : vector<8x32xf32>
    %cst_61 = arith.constant 9.99999974E-6 : f32
    %140 = vector.broadcast %cst_61 : f32 to vector<8x1xf32>
    %141 = arith.addf %137, %140 : vector<8x1xf32>
    %142 = math.rsqrt %141 : vector<8x1xf32>
    %143 = vector.broadcast %142 : vector<8x1xf32> to vector<8x32xf32>
    %144 = arith.mulf %139, %143 : vector<8x32xf32>
    %c0_62 = arith.constant 0 : index
    %c0_63 = arith.constant 0 : index
    %c0_64 = arith.constant 0 : index
    %145 = vector.load %arg14[%c0_62, %c0_63, %c0_64] : memref<1x1x32xf32, #tpu.memory_space<vmem>>, vector<1x1x32xf32>
    %146 = vector.shape_cast %145 : vector<1x1x32xf32> to vector<1x32xf32>
    %147 = vector.broadcast %146 : vector<1x32xf32> to vector<8x32xf32>
    %148 = arith.mulf %144, %147 : vector<8x32xf32>
    %c0_65 = arith.constant 0 : index
    %c0_66 = arith.constant 0 : index
    %c0_67 = arith.constant 0 : index
    %149 = vector.load %arg15[%c0_65, %c0_66, %c0_67] : memref<1x1x32xf32, #tpu.memory_space<vmem>>, vector<1x1x32xf32>
    %150 = vector.shape_cast %149 : vector<1x1x32xf32> to vector<1x32xf32>
    %151 = vector.broadcast %150 : vector<1x32xf32> to vector<8x32xf32>
    %152 = arith.addf %148, %151 : vector<8x32xf32>
    %c0_68 = arith.constant 0 : index
    %c0_69 = arith.constant 0 : index
    %153 = vector.load %arg19[%c0_68, %c0_69] : memref<8x32xf32, #tpu.memory_space<vmem>>, vector<8x32xf32>
    tpu.vector_store %arg19[%c0_68, %c0_69], %152 {strides = array<i32>} : memref<8x32xf32, #tpu.memory_space<vmem>>, vector<8x32xf32>,
    %c1_i32 = arith.constant 1 : i32
    %154 = arith.cmpi eq, %arg1, %c1_i32 : i32
    %155 = arith.extui %154 : i1 to i32
    %c0_i32_70 = arith.constant 0 : i32
    %156 = arith.cmpi ne, %155, %c0_i32_70 : i32
    scf.if %156 {
      %c0_71 = arith.constant 0 : index
      %c0_72 = arith.constant 0 : index
      %157 = vector.load %arg19[%c0_71, %c0_72] : memref<8x32xf32, #tpu.memory_space<vmem>>, vector<8x32xf32>
      %cst_73 = arith.constant dense<0.000000e+00> : vector<8xf32>
      %158 = vector.multi_reduction <add>, %157, %cst_73 [1] : vector<8x32xf32> to vector<8xf32>
      %159 = vector.shape_cast %158 : vector<8xf32> to vector<8x1xf32>
      %cst_74 = arith.constant 3.200000e+01 : f32
      %160 = vector.broadcast %cst_74 : f32 to vector<8x1xf32>
      %161 = arith.divf %159, %160 : vector<8x1xf32>
      %162 = vector.broadcast %161 : vector<8x1xf32> to vector<8x32xf32>
      %163 = arith.subf %157, %162 : vector<8x32xf32>
      %164 = arith.mulf %163, %163 : vector<8x32xf32>
      %cst_75 = arith.constant dense<0.000000e+00> : vector<8xf32>
      %165 = vector.multi_reduction <add>, %164, %cst_75 [1] : vector<8x32xf32> to vector<8xf32>
      %166 = vector.shape_cast %165 : vector<8xf32> to vector<8x1xf32>
      %cst_76 = arith.constant 3.200000e+01 : f32
      %167 = vector.broadcast %cst_76 : f32 to vector<8x1xf32>
      %168 = arith.divf %166, %167 : vector<8x1xf32>
      %169 = vector.broadcast %161 : vector<8x1xf32> to vector<8x32xf32>
      %170 = arith.subf %157, %169 : vector<8x32xf32>
      %cst_77 = arith.constant 9.99999974E-6 : f32
      %171 = vector.broadcast %cst_77 : f32 to vector<8x1xf32>
      %172 = arith.addf %168, %171 : vector<8x1xf32>
      %173 = math.rsqrt %172 : vector<8x1xf32>
      %174 = vector.broadcast %173 : vector<8x1xf32> to vector<8x32xf32>
      %175 = arith.mulf %170, %174 : vector<8x32xf32>
      %c0_78 = arith.constant 0 : index
      %c0_79 = arith.constant 0 : index
      %176 = vector.load %arg16[%c0_78, %c0_79] : memref<1x32xf32, #tpu.memory_space<vmem>>, vector<1x32xf32>
      %177 = vector.broadcast %176 : vector<1x32xf32> to vector<8x32xf32>
      %178 = arith.mulf %175, %177 : vector<8x32xf32>
      %c0_80 = arith.constant 0 : index
      %c0_81 = arith.constant 0 : index
      %179 = vector.load %arg17[%c0_80, %c0_81] : memref<1x32xf32, #tpu.memory_space<vmem>>, vector<1x32xf32>
      %180 = vector.broadcast %179 : vector<1x32xf32> to vector<8x32xf32>
      %181 = arith.addf %178, %180 : vector<8x32xf32>
      %c0_82 = arith.constant 0 : index
      %c0_83 = arith.constant 0 : index
      %c0_84 = arith.constant 0 : index
      %182 = vector.load %arg18[%c0_82, %c0_83, %c0_84] : memref<1x8x32xf32, #tpu.memory_space<vmem>>, vector<1x8x32xf32>
      %183 = vector.shape_cast %182 : vector<1x8x32xf32> to vector<8x32xf32>
      %184 = vector.shape_cast %181 : vector<8x32xf32> to vector<1x8x32xf32>
      tpu.vector_store %arg18[%c0_82, %c0_83, %c0_84], %184 {strides = array<i32>} : memref<1x8x32xf32, #tpu.memory_space<vmem>>, vector<1x8x32xf32>,
    } else {
    }
    return
  }
  func.func @transform_0(%arg0: i32, %arg1: i32) -> (i32, i32, i32) {
    %c0_i32 = arith.constant 0 : i32
    %c0_i32_0 = arith.constant 0 : i32
    %c0_i32_1 = arith.constant 0 : i32
    return %arg0, %c0_i32, %c0_i32_0 : i32, i32, i32
  }
  func.func @transform_1(%arg0: i32, %arg1: i32) -> (i32, i32) {
    %c0_i32 = arith.constant 0 : i32
    %c0_i32_0 = arith.constant 0 : i32
    %c0_i32_1 = arith.constant 0 : i32
    return %c0_i32, %c0_i32_0 : i32, i32
  }
  func.func @transform_2(%arg0: i32, %arg1: i32) -> (i32, i32, i32) {
    %c0_i32 = arith.constant 0 : i32
    %c0_i32_0 = arith.constant 0 : i32
    %c0_i32_1 = arith.constant 0 : i32
    return %arg1, %c0_i32, %c0_i32_0 : i32, i32, i32
  }
  func.func @transform_3(%arg0: i32, %arg1: i32) -> (i32, i32, i32) {
    %c0_i32 = arith.constant 0 : i32
    %c0_i32_0 = arith.constant 0 : i32
    %c0_i32_1 = arith.constant 0 : i32
    return %arg1, %c0_i32, %c0_i32_0 : i32, i32, i32
  }
  func.func @transform_4(%arg0: i32, %arg1: i32) -> (i32, i32, i32) {
    %c0_i32 = arith.constant 0 : i32
    %c0_i32_0 = arith.constant 0 : i32
    %c0_i32_1 = arith.constant 0 : i32
    return %arg1, %c0_i32, %c0_i32_0 : i32, i32, i32
  }
  func.func @transform_5(%arg0: i32, %arg1: i32) -> (i32, i32, i32) {
    %c0_i32 = arith.constant 0 : i32
    %c0_i32_0 = arith.constant 0 : i32
    %c0_i32_1 = arith.constant 0 : i32
    return %arg1, %c0_i32, %c0_i32_0 : i32, i32, i32
  }
  func.func @transform_6(%arg0: i32, %arg1: i32) -> (i32, i32, i32) {
    %c0_i32 = arith.constant 0 : i32
    %c0_i32_0 = arith.constant 0 : i32
    %c0_i32_1 = arith.constant 0 : i32
    return %arg1, %c0_i32, %c0_i32_0 : i32, i32, i32
  }
  func.func @transform_7(%arg0: i32, %arg1: i32) -> (i32, i32, i32) {
    %c0_i32 = arith.constant 0 : i32
    %c0_i32_0 = arith.constant 0 : i32
    %c0_i32_1 = arith.constant 0 : i32
    return %arg1, %c0_i32, %c0_i32_0 : i32, i32, i32
  }
  func.func @transform_8(%arg0: i32, %arg1: i32) -> (i32, i32, i32) {
    %c0_i32 = arith.constant 0 : i32
    %c0_i32_0 = arith.constant 0 : i32
    %c0_i32_1 = arith.constant 0 : i32
    return %arg1, %c0_i32, %c0_i32_0 : i32, i32, i32
  }
  func.func @transform_9(%arg0: i32, %arg1: i32) -> (i32, i32, i32) {
    %c0_i32 = arith.constant 0 : i32
    %c0_i32_0 = arith.constant 0 : i32
    %c0_i32_1 = arith.constant 0 : i32
    return %arg1, %c0_i32, %c0_i32_0 : i32, i32, i32
  }
  func.func @transform_10(%arg0: i32, %arg1: i32) -> (i32, i32, i32) {
    %c0_i32 = arith.constant 0 : i32
    %c0_i32_0 = arith.constant 0 : i32
    %c0_i32_1 = arith.constant 0 : i32
    return %arg1, %c0_i32, %c0_i32_0 : i32, i32, i32
  }
  func.func @transform_11(%arg0: i32, %arg1: i32) -> (i32, i32, i32) {
    %c0_i32 = arith.constant 0 : i32
    %c0_i32_0 = arith.constant 0 : i32
    %c0_i32_1 = arith.constant 0 : i32
    return %arg1, %c0_i32, %c0_i32_0 : i32, i32, i32
  }
  func.func @transform_12(%arg0: i32, %arg1: i32) -> (i32, i32, i32) {
    %c0_i32 = arith.constant 0 : i32
    %c0_i32_0 = arith.constant 0 : i32
    %c0_i32_1 = arith.constant 0 : i32
    return %arg1, %c0_i32, %c0_i32_0 : i32, i32, i32
  }
  func.func @transform_13(%arg0: i32, %arg1: i32) -> (i32, i32, i32) {
    %c0_i32 = arith.constant 0 : i32
    %c0_i32_0 = arith.constant 0 : i32
    %c0_i32_1 = arith.constant 0 : i32
    return %arg1, %c0_i32, %c0_i32_0 : i32, i32, i32
  }
  func.func @transform_14(%arg0: i32, %arg1: i32) -> (i32, i32) {
    %c0_i32 = arith.constant 0 : i32
    %c0_i32_0 = arith.constant 0 : i32
    %c0_i32_1 = arith.constant 0 : i32
    return %c0_i32, %c0_i32_0 : i32, i32
  }
  func.func @transform_15(%arg0: i32, %arg1: i32) -> (i32, i32) {
    %c0_i32 = arith.constant 0 : i32
    %c0_i32_0 = arith.constant 0 : i32
    %c0_i32_1 = arith.constant 0 : i32
    return %c0_i32, %c0_i32_0 : i32, i32
  }
  func.func @transform_16(%arg0: i32, %arg1: i32) -> (i32, i32, i32) {
    %c0_i32 = arith.constant 0 : i32
    %c0_i32_0 = arith.constant 0 : i32
    %c0_i32_1 = arith.constant 0 : i32
    return %arg0, %c0_i32, %c0_i32_0 : i32, i32, i32
  }
}

</mosaic_0001>

<llo_original>
// kernel: tpu_custom_call.1
$region0: #{tpu_custom_call.1}
  #allocation0 [shape = 'u32[]', space=smem, size = 0x4, offset = 0x4, fixed_abs, tag = 'smem constant byte address 0x4 - core index']
  #allocation1 [shape = 'u32[72,128]{1,0:T(1,128)}', space=vmem, size = 0x9000, scoped, tag = 'internal scratch']
  #allocation2 [shape = 'f32[8,32]{1,0:T(8,128)}', space=vmem, size = 0x1000, scoped, tag = 'scratch operand']
  %s0 = inlined_call_operand.hbm [shape: f32[2,8,32], index: 0, kind: input, shape index: {}]
  %s1 = inlined_call_operand.hbm [shape: f32[8,32], index: 1, kind: input, shape index: {}]
  %s2 = inlined_call_operand.vmem [shape: f32[2,32,96], index: 2, kind: input, shape index: {}]
  %s3 = inlined_call_operand.vmem [shape: f32[2,1,96], index: 3, kind: input, shape index: {}]
  %s4 = inlined_call_operand.vmem [shape: f32[2,32,32], index: 4, kind: input, shape index: {}]
  %s5 = inlined_call_operand.hbm [shape: f32[2,1,32], index: 5, kind: input, shape index: {}]
  %s6 = inlined_call_operand.vmem [shape: f32[2,1,32], index: 6, kind: input, shape index: {}]
  %s7 = inlined_call_operand.hbm [shape: f32[2,1,32], index: 7, kind: input, shape index: {}]
  %s8 = inlined_call_operand.vmem [shape: f32[2,32,64], index: 8, kind: input, shape index: {}]
  %s9 = inlined_call_operand.vmem [shape: f32[2,1,64], index: 9, kind: input, shape index: {}]
  %s10 = inlined_call_operand.vmem [shape: f32[2,64,32], index: 10, kind: input, shape index: {}]
  %s11 = inlined_call_operand.vmem [shape: f32[2,1,32], index: 11, kind: input, shape index: {}]
  %s12 = inlined_call_operand.vmem [shape: f32[2,1,32], index: 12, kind: input, shape index: {}]
  %s13 = inlined_call_operand.hbm [shape: f32[2,1,32], index: 13, kind: input, shape index: {}]
  %s14 = inlined_call_operand.vmem [shape: f32[1,32], index: 14, kind: input, shape index: {}]
  %s15 = inlined_call_operand.vmem [shape: f32[1,32], index: 15, kind: input, shape index: {}]
  %s16 = inlined_call_operand.hbm [shape: f32[2,8,32], index: 16, kind: output, shape index: {}]
  %s17 = sld [smem:[#allocation0]]
  $region125: #{tpu_custom_call.1} parent=0
    _
  %s19 = ssub.s32 1, %s17
  %s20 = scalar_select 0, %s19, %s17
  $region1: #{tpu_custom_call.1} parent=0
    #allocation3 [shape = 'u8[8192]{0}', space=vmem, size = 0x2000, scoped, tag = 'input window, operand 0']
    #allocation4 [shape = 's32[2]{0}', space=sflag, size = 0x8, scoped, tag = 'scoped memory for tpu_custom_call.1']
    #allocation5 [shape = 's32[2]{0}', space=sflag, size = 0x8, scoped, tag = 'scoped memory for tpu_custom_call.1']
    #allocation6 [shape = 'u8[4096]{0}', space=vmem, size = 0x1000, scoped, tag = 'input window, operand 1, single buffered']
    #allocation7 [shape = 's32[1]{0}', space=sflag, size = 0x4, scoped, tag = 'scoped memory for tpu_custom_call.1']
    #allocation8 [shape = 'u8[1024]{0}', space=vmem, size = 0x400, scoped, tag = 'input window, operand 5']
    #allocation9 [shape = 'u8[1024]{0}', space=vmem, size = 0x400, scoped, tag = 'input window, operand 7']
    #allocation10 [shape = 'u8[1024]{0}', space=vmem, size = 0x400, scoped, tag = 'input window, operand 13']
    #allocation11 [shape = 'u8[8192]{0}', space=vmem, size = 0x2000, scoped, tag = 'output window, operand 0']
    %21 = vsyncpa [#allocation4], 0
    %s22 = scalar_lea.sflag [#allocation4], 1
    %23 = vsyncpa %s22, 0
    %24 = vsyncpa [#allocation7], 0
    %25 = vsyncpa [#allocation5], 0
    %s26 = scalar_lea.sflag [#allocation5], 1
    %27 = vsyncpa %s26, 0
    loop: start=0, step=1, limit=6
    $region2: #{tpu_custom_call.1} parent=1 // loop_pre_header
      _
    $region3: #{tpu_custom_call.1} parent=1 // loop_header
      %s29 = sphi 0, %s33
      %p30 = scmp.ge.s32.totalorder %s29, 6
      %s36 = sphi 0, %s48
      %s37 = sphi 0, %s44
      %s38 = sphi 0, %s36
      %s39 = sphi 0, %s37
      %s40 = sphi 0, %s38
      %s41 = sphi 0, %s39
      %s51 = sphi 0, %s53
      %s54 = sphi 0, %s51
      %s55 = sphi 0, %s54
      %s71 = sphi 0, %s55
      %s75 = sphi 0, %s75
      %s77 = sphi 0, %s75
      %s78 = sphi 0, %s77
      %s92 = sphi 0, %s78
      %s98 = sphi 0, %s100
      %s101 = sphi 0, %s98
      %s102 = sphi 0, %s101
      %s118 = sphi 0, %s102
      %s124 = sphi 0, %s126
      %s127 = sphi 0, %s124
      %s128 = sphi 0, %s127
      %s144 = sphi 0, %s128
      %s150 = sphi 0, %s152
      %s153 = sphi 0, %s150
      %s154 = sphi 0, %s153
      %s170 = sphi 0, %s154
      %s176 = sphi 0, %s178
      %s179 = sphi 0, %s176
      %s180 = sphi 0, %s179
      %s196 = sphi 0, %s180
      %s202 = sphi 0, %s204
      %s205 = sphi 0, %s202
      %s206 = sphi 0, %s205
      %s222 = sphi 0, %s206
      %s228 = sphi 0, %s230
      %s231 = sphi 0, %s228
      %s232 = sphi 0, %s231
      %s248 = sphi 0, %s232
      %s254 = sphi 0, %s256
      %s257 = sphi 0, %s254
      %s258 = sphi 0, %s257
      %s274 = sphi 0, %s258
      %s280 = sphi 0, %s282
      %s283 = sphi 0, %s280
      %s284 = sphi 0, %s283
      %s300 = sphi 0, %s284
      %s306 = sphi 0, %s308
      %s309 = sphi 0, %s306
      %s310 = sphi 0, %s309
      %s326 = sphi 0, %s310
      %s332 = sphi 0, %s334
      %s335 = sphi 0, %s332
      %s336 = sphi 0, %s335
      %s352 = sphi 0, %s336
      %s358 = sphi 0, %s360
      %s361 = sphi 0, %s358
      %s362 = sphi 0, %s361
      %s378 = sphi 0, %s362
      %s384 = sphi 0, %s386
      %s387 = sphi 0, %s384
      %s388 = sphi 0, %s387
      %s404 = sphi 0, %s388
      %s408 = sphi 0, %s408
      %s410 = sphi 0, %s408
      %s411 = sphi 0, %s410
      %s425 = sphi 0, %s411
      %s429 = sphi 0, %s429
      %s431 = sphi 0, %s429
      %s432 = sphi 0, %s431
      %s446 = sphi 0, %s432
      %s452 = sphi 0, %s454
      %s455 = sphi 0, %s452
      %s456 = sphi 0, %s455
      %s472 = sphi 0, %s456
    $region4: #{tpu_custom_call.1} parent=1 // loop_header_branch
      %32 = sbr.rel (%p30) target = $region8
    $region5: #{tpu_custom_call.1} parent=1 // loop_body
      %s34 = ssub.s32 %s29, 1
      %s35 = ssub.s32 %s29, 2
      %s42 = sadd.s32 1, %s37
      %p43 = scmp.ge.s32.totalorder %s42, 2
      %s44 = scalar_select %p43, 0, %s42
      %s45 = sadd.s32 1, %s36
      %s46 = scalar_select %p43, %s45, %s36
      %p47 = scmp.ge.s32.totalorder %s46, 2
      %s48 = scalar_select %p47, 0, %s46
      %s49 = ssub.s32 %s36, %s48
      %p50 = scmp.eq.s32.totalorder %s49, 0
      %s52 = sadd.s32 %s51, 1
      %s53 = scalar_select %p50, %s51, %s52
      %p56 = pneg %p50
      %p57 = scmp.eq.s32.totalorder %s29, 3
      %p58 = por %p56, %p57
      %p59 = scmp.ne.s32.totalorder %s51, %s54
      %p60 = scmp.eq.s32.totalorder %s29, 0
      %p61 = por %p59, %p60
      %p62 = scmp.ne.s32.totalorder %s51, %s54
      %p63 = scmp.eq.s32.totalorder %s34, 3
      %p64 = por %p62, %p63
      %p65 = scmp.ne.s32.totalorder %s54, %s55
      %p66 = scmp.eq.s32.totalorder %s34, 0
      %p67 = por %p65, %p66
      %p68 = scmp.ne.s32.totalorder %s54, %s55
      %p69 = scmp.eq.s32.totalorder %s35, 3
      %p70 = por %p68, %p69
      %p72 = scmp.ne.s32.totalorder %s55, %s71
      %p73 = scmp.eq.s32.totalorder %s35, 0
      %p74 = por %p72, %p73
      %s76 = sadd.s32 %s75, 1
      %p79 = scmp.eq.s32.totalorder %s29, 3
      %p80 = scmp.ne.s32.totalorder %s75, %s77
      %p81 = scmp.eq.s32.totalorder %s29, 0
      %p82 = por %p80, %p81
      %p83 = scmp.ne.s32.totalorder %s75, %s77
      %p84 = scmp.eq.s32.totalorder %s34, 3
      %p85 = por %p83, %p84
      %p86 = scmp.ne.s32.totalorder %s77, %s78
      %p87 = scmp.eq.s32.totalorder %s34, 0
      %p88 = por %p86, %p87
      %p89 = scmp.ne.s32.totalorder %s77, %s78
      %p90 = scmp.eq.s32.totalorder %s35, 3
      %p91 = por %p89, %p90
      %p93 = scmp.ne.s32.totalorder %s78, %s92
      %p94 = scmp.eq.s32.totalorder %s35, 0
      %p95 = por %p93, %p94
      %s96 = ssub.s32 %s37, %s44
      %p97 = scmp.eq.s32.totalorder %s96, 0
      %s99 = sadd.s32 %s98, 1
      %s100 = scalar_select %p97, %s98, %s99
      %p103 = pneg %p97
      %p104 = scmp.eq.s32.totalorder %s29, 3
      %p105 = por %p103, %p104
      %p106 = scmp.ne.s32.totalorder %s98, %s101
      %p107 = scmp.eq.s32.totalorder %s29, 0
      %p108 = por %p106, %p107
      %p109 = scmp.ne.s32.totalorder %s98, %s101
      %p110 = scmp.eq.s32.totalorder %s34, 3
      %p111 = por %p109, %p110
      %p112 = scmp.ne.s32.totalorder %s101, %s102
      %p113 = scmp.eq.s32.totalorder %s34, 0
      %p114 = por %p112, %p113
      %p115 = scmp.ne.s32.totalorder %s101, %s102
      %p116 = scmp.eq.s32.totalorder %s35, 3
      %p117 = por %p115, %p116
      %p119 = scmp.ne.s32.totalorder %s102, %s118
      %p120 = scmp.eq.s32.totalorder %s35, 0
      %p121 = por %p119, %p120
      %s122 = ssub.s32 %s37, %s44
      %p123 = scmp.eq.s32.totalorder %s122, 0
      %s125 = sadd.s32 %s124, 1
      %s126 = scalar_select %p123, %s124, %s125
      %p129 = pneg %p123
      %p130 = scmp.eq.s32.totalorder %s29, 3
      %p131 = por %p129, %p130
      %p132 = scmp.ne.s32.totalorder %s124, %s127
      %p133 = scmp.eq.s32.totalorder %s29, 0
      %p134 = por %p132, %p133
      %p135 = scmp.ne.s32.totalorder %s124, %s127
      %p136 = scmp.eq.s32.totalorder %s34, 3
      %p137 = por %p135, %p136
      %p138 = scmp.ne.s32.totalorder %s127, %s128
      %p139 = scmp.eq.s32.totalorder %s34, 0
      %p140 = por %p138, %p139
      %p141 = scmp.ne.s32.totalorder %s127, %s128
      %p142 = scmp.eq.s32.totalorder %s35, 3
      %p143 = por %p141, %p142
      %p145 = scmp.ne.s32.totalorder %s128, %s144
      %p146 = scmp.eq.s32.totalorder %s35, 0
      %p147 = por %p145, %p146
      %s148 = ssub.s32 %s37, %s44
      %p149 = scmp.eq.s32.totalorder %s148, 0
      %s151 = sadd.s32 %s150, 1
      %s152 = scalar_select %p149, %s150, %s151
      %p155 = pneg %p149
      %p156 = scmp.eq.s32.totalorder %s29, 3
      %p157 = por %p155, %p156
      %p158 = scmp.ne.s32.totalorder %s150, %s153
      %p159 = scmp.eq.s32.totalorder %s29, 0
      %p160 = por %p158, %p159
      %p161 = scmp.ne.s32.totalorder %s150, %s153
      %p162 = scmp.eq.s32.totalorder %s34, 3
      %p163 = por %p161, %p162
      %p164 = scmp.ne.s32.totalorder %s153, %s154
      %p165 = scmp.eq.s32.totalorder %s34, 0
      %p166 = por %p164, %p165
      %p167 = scmp.ne.s32.totalorder %s153, %s154
      %p168 = scmp.eq.s32.totalorder %s35, 3
      %p169 = por %p167, %p168
      %p171 = scmp.ne.s32.totalorder %s154, %s170
      %p172 = scmp.eq.s32.totalorder %s35, 0
      %p173 = por %p171, %p172
      %s174 = ssub.s32 %s37, %s44
      %p175 = scmp.eq.s32.totalorder %s174, 0
      %s177 = sadd.s32 %s176, 1
      %s178 = scalar_select %p175, %s176, %s177
      %p181 = pneg %p175
      %p182 = scmp.eq.s32.totalorder %s29, 3
      %p183 = por %p181, %p182
      %p184 = scmp.ne.s32.totalorder %s176, %s179
      %p185 = scmp.eq.s32.totalorder %s29, 0
      %p186 = por %p184, %p185
      %p187 = scmp.ne.s32.totalorder %s176, %s179
      %p188 = scmp.eq.s32.totalorder %s34, 3
      %p189 = por %p187, %p188
      %p190 = scmp.ne.s32.totalorder %s179, %s180
      %p191 = scmp.eq.s32.totalorder %s34, 0
      %p192 = por %p190, %p191
      %p193 = scmp.ne.s32.totalorder %s179, %s180
      %p194 = scmp.eq.s32.totalorder %s35, 3
      %p195 = por %p193, %p194
      %p197 = scmp.ne.s32.totalorder %s180, %s196
      %p198 = scmp.eq.s32.totalorder %s35, 0
      %p199 = por %p197, %p198
      %s200 = ssub.s32 %s37, %s44
      %p201 = scmp.eq.s32.totalorder %s200, 0
      %s203 = sadd.s32 %s202, 1
      %s204 = scalar_select %p201, %s202, %s203
      %p207 = pneg %p201
      %p208 = scmp.eq.s32.totalorder %s29, 3
      %p209 = por %p207, %p208
      %p210 = scmp.ne.s32.totalorder %s202, %s205
      %p211 = scmp.eq.s32.totalorder %s29, 0
      %p212 = por %p210, %p211
      %p213 = scmp.ne.s32.totalorder %s202, %s205
      %p214 = scmp.eq.s32.totalorder %s34, 3
      %p215 = por %p213, %p214
      %p216 = scmp.ne.s32.totalorder %s205, %s206
      %p217 = scmp.eq.s32.totalorder %s34, 0
      %p218 = por %p216, %p217
      %p219 = scmp.ne.s32.totalorder %s205, %s206
      %p220 = scmp.eq.s32.totalorder %s35, 3
      %p221 = por %p219, %p220
      %p223 = scmp.ne.s32.totalorder %s206, %s222
      %p224 = scmp.eq.s32.totalorder %s35, 0
      %p225 = por %p223, %p224
      %s226 = ssub.s32 %s37, %s44
      %p227 = scmp.eq.s32.totalorder %s226, 0
      %s229 = sadd.s32 %s228, 1
      %s230 = scalar_select %p227, %s228, %s229
      %p233 = pneg %p227
      %p234 = scmp.eq.s32.totalorder %s29, 3
      %p235 = por %p233, %p234
      %p236 = scmp.ne.s32.totalorder %s228, %s231
      %p237 = scmp.eq.s32.totalorder %s29, 0
      %p238 = por %p236, %p237
      %p239 = scmp.ne.s32.totalorder %s228, %s231
      %p240 = scmp.eq.s32.totalorder %s34, 3
      %p241 = por %p239, %p240
      %p242 = scmp.ne.s32.totalorder %s231, %s232
      %p243 = scmp.eq.s32.totalorder %s34, 0
      %p244 = por %p242, %p243
      %p245 = scmp.ne.s32.totalorder %s231, %s232
      %p246 = scmp.eq.s32.totalorder %s35, 3
      %p247 = por %p245, %p246
      %p249 = scmp.ne.s32.totalorder %s232, %s248
      %p250 = scmp.eq.s32.totalorder %s35, 0
      %p251 = por %p249, %p250
      %s252 = ssub.s32 %s37, %s44
      %p253 = scmp.eq.s32.totalorder %s252, 0
      %s255 = sadd.s32 %s254, 1
      %s256 = scalar_select %p253, %s254, %s255
      %p259 = pneg %p253
      %p260 = scmp.eq.s32.totalorder %s29, 3
      %p261 = por %p259, %p260
      %p262 = scmp.ne.s32.totalorder %s254, %s257
      %p263 = scmp.eq.s32.totalorder %s29, 0
      %p264 = por %p262, %p263
      %p265 = scmp.ne.s32.totalorder %s254, %s257
      %p266 = scmp.eq.s32.totalorder %s34, 3
      %p267 = por %p265, %p266
      %p268 = scmp.ne.s32.totalorder %s257, %s258
      %p269 = scmp.eq.s32.totalorder %s34, 0
      %p270 = por %p268, %p269
      %p271 = scmp.ne.s32.totalorder %s257, %s258
      %p272 = scmp.eq.s32.totalorder %s35, 3
      %p273 = por %p271, %p272
      %p275 = scmp.ne.s32.totalorder %s258, %s274
      %p276 = scmp.eq.s32.totalorder %s35, 0
      %p277 = por %p275, %p276
      %s278 = ssub.s32 %s37, %s44
      %p279 = scmp.eq.s32.totalorder %s278, 0
      %s281 = sadd.s32 %s280, 1
      %s282 = scalar_select %p279, %s280, %s281
      %p285 = pneg %p279
      %p286 = scmp.eq.s32.totalorder %s29, 3
      %p287 = por %p285, %p286
      %p288 = scmp.ne.s32.totalorder %s280, %s283
      %p289 = scmp.eq.s32.totalorder %s29, 0
      %p290 = por %p288, %p289
      %p291 = scmp.ne.s32.totalorder %s280, %s283
      %p292 = scmp.eq.s32.totalorder %s34, 3
      %p293 = por %p291, %p292
      %p294 = scmp.ne.s32.totalorder %s283, %s284
      %p295 = scmp.eq.s32.totalorder %s34, 0
      %p296 = por %p294, %p295
      %p297 = scmp.ne.s32.totalorder %s283, %s284
      %p298 = scmp.eq.s32.totalorder %s35, 3
      %p299 = por %p297, %p298
      %p301 = scmp.ne.s32.totalorder %s284, %s300
      %p302 = scmp.eq.s32.totalorder %s35, 0
      %p303 = por %p301, %p302
      %s304 = ssub.s32 %s37, %s44
      %p305 = scmp.eq.s32.totalorder %s304, 0
      %s307 = sadd.s32 %s306, 1
      %s308 = scalar_select %p305, %s306, %s307
      %p311 = pneg %p305
      %p312 = scmp.eq.s32.totalorder %s29, 3
      %p313 = por %p311, %p312
      %p314 = scmp.ne.s32.totalorder %s306, %s309
      %p315 = scmp.eq.s32.totalorder %s29, 0
      %p316 = por %p314, %p315
      %p317 = scmp.ne.s32.totalorder %s306, %s309
      %p318 = scmp.eq.s32.totalorder %s34, 3
      %p319 = por %p317, %p318
      %p320 = scmp.ne.s32.totalorder %s309, %s310
      %p321 = scmp.eq.s32.totalorder %s34, 0
      %p322 = por %p320, %p321
      %p323 = scmp.ne.s32.totalorder %s309, %s310
      %p324 = scmp.eq.s32.totalorder %s35, 3
      %p325 = por %p323, %p324
      %p327 = scmp.ne.s32.totalorder %s310, %s326
      %p328 = scmp.eq.s32.totalorder %s35, 0
      %p329 = por %p327, %p328
      %s330 = ssub.s32 %s37, %s44
      %p331 = scmp.eq.s32.totalorder %s330, 0
      %s333 = sadd.s32 %s332, 1
      %s334 = scalar_select %p331, %s332, %s333
      %p337 = pneg %p331
      %p338 = scmp.eq.s32.totalorder %s29, 3
      %p339 = por %p337, %p338
      %p340 = scmp.ne.s32.totalorder %s332, %s335
      %p341 = scmp.eq.s32.totalorder %s29, 0
      %p342 = por %p340, %p341
      %p343 = scmp.ne.s32.totalorder %s332, %s335
      %p344 = scmp.eq.s32.totalorder %s34, 3
      %p345 = por %p343, %p344
      %p346 = scmp.ne.s32.totalorder %s335, %s336
      %p347 = scmp.eq.s32.totalorder %s34, 0
      %p348 = por %p346, %p347
      %p349 = scmp.ne.s32.totalorder %s335, %s336
      %p350 = scmp.eq.s32.totalorder %s35, 3
      %p351 = por %p349, %p350
      %p353 = scmp.ne.s32.totalorder %s336, %s352
      %p354 = scmp.eq.s32.totalorder %s35, 0
      %p355 = por %p353, %p354
      %s356 = ssub.s32 %s37, %s44
      %p357 = scmp.eq.s32.totalorder %s356, 0
      %s359 = sadd.s32 %s358, 1
      %s360 = scalar_select %p357, %s358, %s359
      %p363 = pneg %p357
      %p364 = scmp.eq.s32.totalorder %s29, 3
      %p365 = por %p363, %p364
      %p366 = scmp.ne.s32.totalorder %s358, %s361
      %p367 = scmp.eq.s32.totalorder %s29, 0
      %p368 = por %p366, %p367
      %p369 = scmp.ne.s32.totalorder %s358, %s361
      %p370 = scmp.eq.s32.totalorder %s34, 3
      %p371 = por %p369, %p370
      %p372 = scmp.ne.s32.totalorder %s361, %s362
      %p373 = scmp.eq.s32.totalorder %s34, 0
      %p374 = por %p372, %p373
      %p375 = scmp.ne.s32.totalorder %s361, %s362
      %p376 = scmp.eq.s32.totalorder %s35, 3
      %p377 = por %p375, %p376
      %p379 = scmp.ne.s32.totalorder %s362, %s378
      %p380 = scmp.eq.s32.totalorder %s35, 0
      %p381 = por %p379, %p380
      %s382 = ssub.s32 %s37, %s44
      %p383 = scmp.eq.s32.totalorder %s382, 0
      %s385 = sadd.s32 %s384, 1
      %s386 = scalar_select %p383, %s384, %s385
      %p389 = pneg %p383
      %p390 = scmp.eq.s32.totalorder %s29, 3
      %p391 = por %p389, %p390
      %p392 = scmp.ne.s32.totalorder %s384, %s387
      %p393 = scmp.eq.s32.totalorder %s29, 0
      %p394 = por %p392, %p393
      %p395 = scmp.ne.s32.totalorder %s384, %s387
      %p396 = scmp.eq.s32.totalorder %s34, 3
      %p397 = por %p395, %p396
      %p398 = scmp.ne.s32.totalorder %s387, %s388
      %p399 = scmp.eq.s32.totalorder %s34, 0
      %p400 = por %p398, %p399
      %p401 = scmp.ne.s32.totalorder %s387, %s388
      %p402 = scmp.eq.s32.totalorder %s35, 3
      %p403 = por %p401, %p402
      %p405 = scmp.ne.s32.totalorder %s388, %s404
      %p406 = scmp.eq.s32.totalorder %s35, 0
      %p407 = por %p405, %p406
      %s409 = sadd.s32 %s408, 1
      %p412 = scmp.eq.s32.totalorder %s29, 3
      %p413 = scmp.ne.s32.totalorder %s408, %s410
      %p414 = scmp.eq.s32.totalorder %s29, 0
      %p415 = por %p413, %p414
      %p416 = scmp.ne.s32.totalorder %s408, %s410
      %p417 = scmp.eq.s32.totalorder %s34, 3
      %p418 = por %p416, %p417
      %p419 = scmp.ne.s32.totalorder %s410, %s411
      %p420 = scmp.eq.s32.totalorder %s34, 0
      %p421 = por %p419, %p420
      %p422 = scmp.ne.s32.totalorder %s410, %s411
      %p423 = scmp.eq.s32.totalorder %s35, 3
      %p424 = por %p422, %p423
      %p426 = scmp.ne.s32.totalorder %s411, %s425
      %p427 = scmp.eq.s32.totalorder %s35, 0
      %p428 = por %p426, %p427
      %s430 = sadd.s32 %s429, 1
      %p433 = scmp.eq.s32.totalorder %s29, 3
      %p434 = scmp.ne.s32.totalorder %s429, %s431
      %p435 = scmp.eq.s32.totalorder %s29, 0
      %p436 = por %p434, %p435
      %p437 = scmp.ne.s32.totalorder %s429, %s431
      %p438 = scmp.eq.s32.totalorder %s34, 3
      %p439 = por %p437, %p438
      %p440 = scmp.ne.s32.totalorder %s431, %s432
      %p441 = scmp.eq.s32.totalorder %s34, 0
      %p442 = por %p440, %p441
      %p443 = scmp.ne.s32.totalorder %s431, %s432
      %p444 = scmp.eq.s32.totalorder %s35, 3
      %p445 = por %p443, %p444
      %p447 = scmp.ne.s32.totalorder %s432, %s446
      %p448 = scmp.eq.s32.totalorder %s35, 0
      %p449 = por %p447, %p448
      %s450 = ssub.s32 %s36, %s48
      %p451 = scmp.eq.s32.totalorder %s450, 0
      %s453 = sadd.s32 %s452, 1
      %s454 = scalar_select %p451, %s452, %s453
      %p457 = pneg %p451
      %p458 = scmp.eq.s32.totalorder %s29, 3
      %p459 = por %p457, %p458
      %p460 = scmp.ne.s32.totalorder %s452, %s455
      %p461 = scmp.eq.s32.totalorder %s29, 0
      %p462 = por %p460, %p461
      %p463 = scmp.ne.s32.totalorder %s452, %s455
      %p464 = scmp.eq.s32.totalorder %s34, 3
      %p465 = por %p463, %p464
      %p466 = scmp.ne.s32.totalorder %s455, %s456
      %p467 = scmp.eq.s32.totalorder %s34, 0
      %p468 = por %p466, %p467
      %p469 = scmp.ne.s32.totalorder %s455, %s456
      %p470 = scmp.eq.s32.totalorder %s35, 3
      %p471 = por %p469, %p470
      %p473 = scmp.ne.s32.totalorder %s456, %s472
      %p474 = scmp.eq.s32.totalorder %s35, 0
      %p475 = por %p473, %p474
      %p476 = scmp.le.s32.totalorder 1, %s29
      %p477 = scmp.lt.s32.totalorder %s29, 5
      %p478 = pnand %p476, %p477
      %p479 = pneg %p478
      // Predicated region
      $region9: #{tpu_custom_call.1} parent=5 // pred_check
        _
      $region10: #{tpu_custom_call.1} parent=5 // pred_check_branch
        %481 = sbr.rel (%p478) target = $region12
      $region11: #{tpu_custom_call.1} parent=5 // pred_region
        %s482 = ssub.s32 %s29, 1
        // Predicated region
        $region13: #{tpu_custom_call.1} parent=11 // pred_check
          %p483 = pneg %p88
        $region14: #{tpu_custom_call.1} parent=11 // pred_check_branch
          %485 = sbr.rel (%p483) target = $region16
        $region15: #{tpu_custom_call.1} parent=11 // pred_region
          %487 = vsyncadd [#allocation7], 0
          %s489 = sshll.u32 %s1, 4
          %s490 = int_to_ptr.hbm [resolvable:$true] %s489
          %s491 = sshll.u32 [#allocation6], 4
          %s492 = int_to_ptr.vmem [resolvable:$true] %s491
          %494 = dma.hbm_to_vmem [thread:$0]  %s490, 128, %s492, [#allocation7]
        $region16: #{tpu_custom_call.1} parent=11 // pred_fallthru
          _
        // Predicated region
        $region17: #{tpu_custom_call.1} parent=11 // pred_check
          %p495 = pneg %p421
        $region18: #{tpu_custom_call.1} parent=11 // pred_check_branch
          %497 = sbr.rel (%p495) target = $region20
        $region19: #{tpu_custom_call.1} parent=11 // pred_region
          _
        $region20: #{tpu_custom_call.1} parent=11 // pred_fallthru
          _
        // Predicated region
        $region21: #{tpu_custom_call.1} parent=11 // pred_check
          %p498 = pneg %p442
        $region22: #{tpu_custom_call.1} parent=11 // pred_check_branch
          %500 = sbr.rel (%p498) target = $region24
        $region23: #{tpu_custom_call.1} parent=11 // pred_region
          _
        $region24: #{tpu_custom_call.1} parent=11 // pred_fallthru
          _
      $region12: #{tpu_custom_call.1} parent=5 // pred_fallthru
        _
      %p501 = scmp.lt.s32.totalorder %s29, 4
      // Predicated region
      $region25: #{tpu_custom_call.1} parent=5 // pred_check
        %p502 = pneg %p501
      $region26: #{tpu_custom_call.1} parent=5 // pred_check_branch
        %504 = sbr.rel (%p502) target = $region28
      $region27: #{tpu_custom_call.1} parent=5 // pred_region
        // Predicated region
        $region29: #{tpu_custom_call.1} parent=27 // pred_check
          %p505 = pneg %p61
        $region30: #{tpu_custom_call.1} parent=27 // pred_check_branch
          %507 = sbr.rel (%p505) target = $region32
        $region31: #{tpu_custom_call.1} parent=27 // pred_region
          %s508 = sand.u32 %s29, 1
          %s509 = scalar_lea.sflag [#allocation4], %s508
          %s510 = sand.u32 %s51, 1
          %s511 = smul.addr %s510, 8
          %s512 = scalar_lea.vmem [#allocation3], %s511
          %514 = vsyncadd %s509, 0
          %s515 = smul.addr %s36, 8
          %s516 = scalar_lea.hbm %s0, %s515
          %s518 = sshll.u32 %s516, 4
          %s519 = int_to_ptr.hbm [resolvable:$true] %s518
          %s520 = sshll.u32 %s512, 4
          %s521 = int_to_ptr.vmem [resolvable:$true] %s520
          %523 = dma.hbm_to_vmem [thread:$0]  %s519, 128, %s521, %s509
        $region32: #{tpu_custom_call.1} parent=27 // pred_fallthru
          _
        // Predicated region
        $region33: #{tpu_custom_call.1} parent=27 // pred_check
          %p524 = pneg %p108
        $region34: #{tpu_custom_call.1} parent=27 // pred_check_branch
          %526 = sbr.rel (%p524) target = $region36
        $region35: #{tpu_custom_call.1} parent=27 // pred_region
          %p527 = scmp.lt.s32.totalorder %s37, 1
          %s528 = scalar_select %p527, %s37, 1
          %s529 = smul.addr %s528, 4
          %s530 = smul.addr %s529, 8
          %s531 = scalar_lea.vmem %s2, %s530
        $region36: #{tpu_custom_call.1} parent=27 // pred_fallthru
          _
        // Predicated region
        $region37: #{tpu_custom_call.1} parent=27 // pred_check
          %p532 = pneg %p134
        $region38: #{tpu_custom_call.1} parent=27 // pred_check_branch
          %534 = sbr.rel (%p532) target = $region40
        $region39: #{tpu_custom_call.1} parent=27 // pred_region
          %p535 = scmp.lt.s32.totalorder %s37, 1
          %s536 = scalar_select %p535, %s37, 1
          %s537 = scalar_lea.vmem %s3, %s536
        $region40: #{tpu_custom_call.1} parent=27 // pred_fallthru
          _
        // Predicated region
        $region41: #{tpu_custom_call.1} parent=27 // pred_check
          %p538 = pneg %p160
        $region42: #{tpu_custom_call.1} parent=27 // pred_check_branch
          %540 = sbr.rel (%p538) target = $region44
        $region43: #{tpu_custom_call.1} parent=27 // pred_region
          %p541 = scmp.lt.s32.totalorder %s37, 1
          %s542 = scalar_select %p541, %s37, 1
          %s543 = smul.addr %s542, 4
          %s544 = smul.addr %s543, 8
          %s545 = scalar_lea.vmem %s4, %s544
        $region44: #{tpu_custom_call.1} parent=27 // pred_fallthru
          _
        // Predicated region
        $region45: #{tpu_custom_call.1} parent=27 // pred_check
          %p546 = pneg %p186
        $region46: #{tpu_custom_call.1} parent=27 // pred_check_branch
          %548 = sbr.rel (%p546) target = $region48
        $region47: #{tpu_custom_call.1} parent=27 // pred_region
          %s549 = sand.u32 %s29, 1
          %s550 = scalar_lea.sflag [#allocation4], %s549
          %s551 = sand.u32 %s176, 1
          %s552 = scalar_lea.vmem [#allocation8], %s551
          %554 = vsyncadd %s550, 0
          %s555 = scalar_lea.hbm %s5, %s37
          %s557 = sshll.u32 %s555, 4
          %s558 = int_to_ptr.hbm [resolvable:$true] %s557
          %s559 = sshll.u32 %s552, 4
          %s560 = int_to_ptr.vmem [resolvable:$true] %s559
          %562 = dma.hbm_to_vmem [thread:$0]  %s558, 16, %s560, %s550
        $region48: #{tpu_custom_call.1} parent=27 // pred_fallthru
          _
        // Predicated region
        $region49: #{tpu_custom_call.1} parent=27 // pred_check
          %p563 = pneg %p212
        $region50: #{tpu_custom_call.1} parent=27 // pred_check_branch
          %565 = sbr.rel (%p563) target = $region52
        $region51: #{tpu_custom_call.1} parent=27 // pred_region
          %p566 = scmp.lt.s32.totalorder %s37, 1
          %s567 = scalar_select %p566, %s37, 1
          %s568 = scalar_lea.vmem %s6, %s567
        $region52: #{tpu_custom_call.1} parent=27 // pred_fallthru
          _
        // Predicated region
        $region53: #{tpu_custom_call.1} parent=27 // pred_check
          %p569 = pneg %p238
        $region54: #{tpu_custom_call.1} parent=27 // pred_check_branch
          %571 = sbr.rel (%p569) target = $region56
        $region55: #{tpu_custom_call.1} parent=27 // pred_region
          %s572 = sand.u32 %s29, 1
          %s573 = scalar_lea.sflag [#allocation4], %s572
          %s574 = sand.u32 %s228, 1
          %s575 = scalar_lea.vmem [#allocation9], %s574
          %577 = vsyncadd %s573, 0
          %s578 = scalar_lea.hbm %s7, %s37
          %s580 = sshll.u32 %s578, 4
          %s581 = int_to_ptr.hbm [resolvable:$true] %s580
          %s582 = sshll.u32 %s575, 4
          %s583 = int_to_ptr.vmem [resolvable:$true] %s582
          %585 = dma.hbm_to_vmem [thread:$0]  %s581, 16, %s583, %s573
        $region56: #{tpu_custom_call.1} parent=27 // pred_fallthru
          _
        // Predicated region
        $region57: #{tpu_custom_call.1} parent=27 // pred_check
          %p586 = pneg %p264
        $region58: #{tpu_custom_call.1} parent=27 // pred_check_branch
          %588 = sbr.rel (%p586) target = $region60
        $region59: #{tpu_custom_call.1} parent=27 // pred_region
          %p589 = scmp.lt.s32.totalorder %s37, 1
          %s590 = scalar_select %p589, %s37, 1
          %s591 = smul.addr %s590, 4
          %s592 = smul.addr %s591, 8
          %s593 = scalar_lea.vmem %s8, %s592
        $region60: #{tpu_custom_call.1} parent=27 // pred_fallthru
          _
        // Predicated region
        $region61: #{tpu_custom_call.1} parent=27 // pred_check
          %p594 = pneg %p290
        $region62: #{tpu_custom_call.1} parent=27 // pred_check_branch
          %596 = sbr.rel (%p594) target = $region64
        $region63: #{tpu_custom_call.1} parent=27 // pred_region
          %p597 = scmp.lt.s32.totalorder %s37, 1
          %s598 = scalar_select %p597, %s37, 1
          %s599 = scalar_lea.vmem %s9, %s598
        $region64: #{tpu_custom_call.1} parent=27 // pred_fallthru
          _
        // Predicated region
        $region65: #{tpu_custom_call.1} parent=27 // pred_check
          %p600 = pneg %p316
        $region66: #{tpu_custom_call.1} parent=27 // pred_check_branch
          %602 = sbr.rel (%p600) target = $region68
        $region67: #{tpu_custom_call.1} parent=27 // pred_region
          %p603 = scmp.lt.s32.totalorder %s37, 1
          %s604 = scalar_select %p603, %s37, 1
          %s605 = smul.addr %s604, 8
          %s606 = smul.addr %s605, 8
          %s607 = scalar_lea.vmem %s10, %s606
        $region68: #{tpu_custom_call.1} parent=27 // pred_fallthru
          _
        // Predicated region
        $region69: #{tpu_custom_call.1} parent=27 // pred_check
          %p608 = pneg %p342
        $region70: #{tpu_custom_call.1} parent=27 // pred_check_branch
          %610 = sbr.rel (%p608) target = $region72
        $region71: #{tpu_custom_call.1} parent=27 // pred_region
          %p611 = scmp.lt.s32.totalorder %s37, 1
          %s612 = scalar_select %p611, %s37, 1
          %s613 = scalar_lea.vmem %s11, %s612
        $region72: #{tpu_custom_call.1} parent=27 // pred_fallthru
          _
        // Predicated region
        $region73: #{tpu_custom_call.1} parent=27 // pred_check
          %p614 = pneg %p368
        $region74: #{tpu_custom_call.1} parent=27 // pred_check_branch
          %616 = sbr.rel (%p614) target = $region76
        $region75: #{tpu_custom_call.1} parent=27 // pred_region
          %p617 = scmp.lt.s32.totalorder %s37, 1
          %s618 = scalar_select %p617, %s37, 1
          %s619 = scalar_lea.vmem %s12, %s618
        $region76: #{tpu_custom_call.1} parent=27 // pred_fallthru
          _
        // Predicated region
        $region77: #{tpu_custom_call.1} parent=27 // pred_check
          %p620 = pneg %p394
        $region78: #{tpu_custom_call.1} parent=27 // pred_check_branch
          %622 = sbr.rel (%p620) target = $region80
        $region79: #{tpu_custom_call.1} parent=27 // pred_region
          %s623 = sand.u32 %s29, 1
          %s624 = scalar_lea.sflag [#allocation4], %s623
          %s625 = sand.u32 %s384, 1
          %s626 = scalar_lea.vmem [#allocation10], %s625
          %628 = vsyncadd %s624, 0
          %s629 = scalar_lea.hbm %s13, %s37
          %s631 = sshll.u32 %s629, 4
          %s632 = int_to_ptr.hbm [resolvable:$true] %s631
          %s633 = sshll.u32 %s626, 4
          %s634 = int_to_ptr.vmem [resolvable:$true] %s633
          %636 = dma.hbm_to_vmem [thread:$0]  %s632, 16, %s634, %s624
        $region80: #{tpu_custom_call.1} parent=27 // pred_fallthru
          _
      $region28: #{tpu_custom_call.1} parent=5 // pred_fallthru
        _
      %p637 = scmp.le.s32.totalorder 1, %s29
      %p638 = scmp.lt.s32.totalorder %s29, 5
      %p639 = pnand %p637, %p638
      %p640 = pneg %p639
      // Predicated region
      $region81: #{tpu_custom_call.1} parent=5 // pred_check
        _
      $region82: #{tpu_custom_call.1} parent=5 // pred_check_branch
        %642 = sbr.rel (%p639) target = $region84
      $region83: #{tpu_custom_call.1} parent=5 // pred_region
        %s643 = ssub.s32 %s29, 1
        %s644 = sand.u32 %s34, 1
        %s645 = scalar_lea.sflag [#allocation4], %s644
        %s646 = sand.u32 %s54, 1
        %s647 = smul.addr %s646, 8
        %s648 = scalar_lea.vmem [#allocation3], %s647
        // Predicated region
        $region85: #{tpu_custom_call.1} parent=83 // pred_check
          %p649 = pneg %p67
        $region86: #{tpu_custom_call.1} parent=83 // pred_check_branch
          %651 = sbr.rel (%p649) target = $region88
        $region87: #{tpu_custom_call.1} parent=83 // pred_region
          %653 = dma.done %s645, 128
        $region88: #{tpu_custom_call.1} parent=83 // pred_fallthru
          _
        // Predicated region
        $region89: #{tpu_custom_call.1} parent=83 // pred_check
          %p654 = pneg %p88
        $region90: #{tpu_custom_call.1} parent=83 // pred_check_branch
          %656 = sbr.rel (%p654) target = $region92
        $region91: #{tpu_custom_call.1} parent=83 // pred_region
          %658 = dma.done [#allocation7], 128
        $region92: #{tpu_custom_call.1} parent=83 // pred_fallthru
          _
        %s659 = sand.u32 %s34, 1
        %s660 = scalar_lea.sflag [#allocation4], %s659
        %s661 = sand.u32 %s179, 1
        %s662 = scalar_lea.vmem [#allocation8], %s661
        // Predicated region
        $region93: #{tpu_custom_call.1} parent=83 // pred_check
          %p663 = pneg %p192
        $region94: #{tpu_custom_call.1} parent=83 // pred_check_branch
          %665 = sbr.rel (%p663) target = $region96
        $region95: #{tpu_custom_call.1} parent=83 // pred_region
          %667 = dma.done %s660, 16
        $region96: #{tpu_custom_call.1} parent=83 // pred_fallthru
          _
        %s668 = sand.u32 %s34, 1
        %s669 = scalar_lea.sflag [#allocation4], %s668
        %s670 = sand.u32 %s231, 1
        %s671 = scalar_lea.vmem [#allocation9], %s670
        // Predicated region
        $region97: #{tpu_custom_call.1} parent=83 // pred_check
          %p672 = pneg %p244
        $region98: #{tpu_custom_call.1} parent=83 // pred_check_branch
          %674 = sbr.rel (%p672) target = $region100
        $region99: #{tpu_custom_call.1} parent=83 // pred_region
          %676 = dma.done %s669, 16
        $region100: #{tpu_custom_call.1} parent=83 // pred_fallthru
          _
        %s677 = sand.u32 %s34, 1
        %s678 = scalar_lea.sflag [#allocation4], %s677
        %s679 = sand.u32 %s387, 1
        %s680 = scalar_lea.vmem [#allocation10], %s679
        // Predicated region
        $region101: #{tpu_custom_call.1} parent=83 // pred_check
          %p681 = pneg %p400
        $region102: #{tpu_custom_call.1} parent=83 // pred_check_branch
          %683 = sbr.rel (%p681) target = $region104
        $region103: #{tpu_custom_call.1} parent=83 // pred_region
          %685 = dma.done %s678, 16
        $region104: #{tpu_custom_call.1} parent=83 // pred_fallthru
          _
        %s686 = sand.u32 %s34, 1
        %s687 = scalar_lea.sflag [#allocation4], %s686
        %s688 = sand.u32 %s54, 1
        %s689 = smul.addr %s688, 8
        %s690 = scalar_lea.vmem [#allocation3], %s689
        %p691 = pneg %p67
        %p692 = pneg %p64
        %p693 = pneg %p88
        %p694 = pneg %p85
        %p695 = scmp.lt.s32.totalorder %s39, 1
        %s696 = scalar_select %p695, %s39, 1
        %s697 = smul.addr %s696, 4
        %s698 = smul.addr %s697, 8
        %s699 = scalar_lea.vmem %s2, %s698
        %p700 = pneg %p114
        %p701 = pneg %p111
        %p702 = scmp.lt.s32.totalorder %s39, 1
        %s703 = scalar_select %p702, %s39, 1
        %s704 = scalar_lea.vmem %s3, %s703
        %p705 = pneg %p140
        %p706 = pneg %p137
        %p707 = scmp.lt.s32.totalorder %s39, 1
        %s708 = scalar_select %p707, %s39, 1
        %s709 = smul.addr %s708, 4
        %s710 = smul.addr %s709, 8
        %s711 = scalar_lea.vmem %s4, %s710
        %p712 = pneg %p166
        %p713 = pneg %p163
        %s714 = sand.u32 %s34, 1
        %s715 = scalar_lea.sflag [#allocation4], %s714
        %s716 = sand.u32 %s179, 1
        %s717 = scalar_lea.vmem [#allocation8], %s716
        %p718 = pneg %p192
        %p719 = pneg %p189
        %p720 = scmp.lt.s32.totalorder %s39, 1
        %s721 = scalar_select %p720, %s39, 1
        %s722 = scalar_lea.vmem %s6, %s721
        %p723 = pneg %p218
        %p724 = pneg %p215
        %s725 = sand.u32 %s34, 1
        %s726 = scalar_lea.sflag [#allocation4], %s725
        %s727 = sand.u32 %s231, 1
        %s728 = scalar_lea.vmem [#allocation9], %s727
        %p729 = pneg %p244
        %p730 = pneg %p241
        %p731 = scmp.lt.s32.totalorder %s39, 1
        %s732 = scalar_select %p731, %s39, 1
        %s733 = smul.addr %s732, 4
        %s734 = smul.addr %s733, 8
        %s735 = scalar_lea.vmem %s8, %s734
        %p736 = pneg %p270
        %p737 = pneg %p267
        %p738 = scmp.lt.s32.totalorder %s39, 1
        %s739 = scalar_select %p738, %s39, 1
        %s740 = scalar_lea.vmem %s9, %s739
        %p741 = pneg %p296
        %p742 = pneg %p293
        %p743 = scmp.lt.s32.totalorder %s39, 1
        %s744 = scalar_select %p743, %s39, 1
        %s745 = smul.addr %s744, 8
        %s746 = smul.addr %s745, 8
        %s747 = scalar_lea.vmem %s10, %s746
        %p748 = pneg %p322
        %p749 = pneg %p319
        %p750 = scmp.lt.s32.totalorder %s39, 1
        %s751 = scalar_select %p750, %s39, 1
        %s752 = scalar_lea.vmem %s11, %s751
        %p753 = pneg %p348
        %p754 = pneg %p345
        %p755 = scmp.lt.s32.totalorder %s39, 1
        %s756 = scalar_select %p755, %s39, 1
        %s757 = scalar_lea.vmem %s12, %s756
        %p758 = pneg %p374
        %p759 = pneg %p371
        %s760 = sand.u32 %s34, 1
        %s761 = scalar_lea.sflag [#allocation4], %s760
        %s762 = sand.u32 %s387, 1
        %s763 = scalar_lea.vmem [#allocation10], %s762
        %p764 = pneg %p400
        %p765 = pneg %p397
        %p766 = pneg %p421
        %p767 = pneg %p418
        %p768 = pneg %p442
        %p769 = pneg %p439
        %p770 = pneg %p468
        %p771 = pneg %p465
        %s772 = sand.u32 %s455, 1
        %s773 = scalar_lea.sflag [#allocation5], %s772
        %s774 = sand.u32 %s455, 1
        %s775 = smul.addr %s774, 8
        %s776 = scalar_lea.vmem [#allocation11], %s775
        %p777 = scmp.lt.s32.totalorder %s39, 1
        %s778 = scalar_select %p777, %s39, 1
        %s779 = smul.addr %s778, 4
        %s780 = smul.addr %s779, 8
        %s781 = scalar_lea.vmem %s2, %s780
        %p782 = scmp.lt.s32.totalorder %s39, 1
        %s783 = scalar_select %p782, %s39, 1
        %s784 = scalar_lea.vmem %s3, %s783
        %p785 = scmp.lt.s32.totalorder %s39, 1
        %s786 = scalar_select %p785, %s39, 1
        %s787 = smul.addr %s786, 4
        %s788 = smul.addr %s787, 8
        %s789 = scalar_lea.vmem %s4, %s788
        %p790 = scmp.lt.s32.totalorder %s39, 1
        %s791 = scalar_select %p790, %s39, 1
        %s792 = scalar_lea.vmem %s6, %s791
        %p793 = scmp.lt.s32.totalorder %s39, 1
        %s794 = scalar_select %p793, %s39, 1
        %s795 = smul.addr %s794, 4
        %s796 = smul.addr %s795, 8
        %s797 = scalar_lea.vmem %s8, %s796
        %p798 = scmp.lt.s32.totalorder %s39, 1
        %s799 = scalar_select %p798, %s39, 1
        %s800 = scalar_lea.vmem %s9, %s799
        %p801 = scmp.lt.s32.totalorder %s39, 1
        %s802 = scalar_select %p801, %s39, 1
        %s803 = smul.addr %s802, 8
        %s804 = smul.addr %s803, 8
        %s805 = scalar_lea.vmem %s10, %s804
        %p806 = scmp.lt.s32.totalorder %s39, 1
        %s807 = scalar_select %p806, %s39, 1
        %s808 = scalar_lea.vmem %s11, %s807
        %p809 = scmp.lt.s32.totalorder %s39, 1
        %s810 = scalar_select %p809, %s39, 1
        %s811 = scalar_lea.vmem %s12, %s810
        %p812 = scmp.eq.s32.totalorder %s39, 0
        // Predicated region
        $region105: #{tpu_custom_call.1} parent=83 // pred_check
          %p813 = pneg %p812
        $region106: #{tpu_custom_call.1} parent=83 // pred_check_branch
          %815 = sbr.rel (%p813) target = $region108
        $region107: #{tpu_custom_call.1} parent=83 // pred_region
          %v816 = vld [vmem:[%s648] sm:$0xff]
          %v817 = vld [vmem:[#allocation6] sm:$0xff]
          %v818 = vadd.f32 %v816, %v817
          %vm819 = vcmask 261120
          %820 = vst.msk [vmem:[#allocation2] sm:$0xff] %vm819, %v818
        $region108: #{tpu_custom_call.1} parent=83 // pred_fallthru
          _
        %v821 = vld [vmem:[#allocation2] sm:$0xff]
        %v822 = vld [vmem:[%s781] sm:$0xff]
        %v823 = vld [vmem:[%s781 + $0x8] sm:$0xff]
        %v824 = vld [vmem:[%s781 + $0x10] sm:$0xff]
        %v825 = vld [vmem:[%s781 + $0x18] sm:$0xff]
        %v826 = vld [vmem:[%s784] sm:$0x1]
        %v828 = vperm.slane %v826, 0
        %vm830 = vcmask 261120
        %v832 = vsel %vm830, %v821, 0
        %834 = vmatpush.msra.mxu0 0.0
        %835 = vmatpush.msra.mxu0 0.0
        %836 = vmatpush.msra.mxu0 0.0
        %837 = vmatpush.msra.mxu0 0.0
        %838 = vmatpush.msra.mxu0 0.0
        %839 = vmatpush.msra.mxu0 0.0
        %840 = vmatpush.msra.mxu0 0.0
        %841 = vmatpush.msra.mxu0 0.0
        %842 = vmatpush.msra.mxu0 0.0
        %843 = vmatpush.msra.mxu0 0.0
        %844 = vmatpush.msra.mxu0 0.0
        %845 = vmatpush.msra.mxu0 0.0
        %846 = vmatpush.msra.mxu0 %v825
        %847 = vmatpush.msra.mxu0 %v824
        %848 = vmatpush.msra.mxu0 %v823
        %849 = vmatpush.msra.mxu0 %v822
        %850 = vmatmul.f32.gmra.mxu0 %v832
        %v851 = vpop.f32.mrf.mxu0
        %v852 = vadd.f32 %v828, %v851
        %853 = vdwg.mxu0
        %855 = vrot.lane.b32.xlu0 %v852, 96
        %v856 = vpop.permute.xlu0 %855
        %vm857 = vcmask 64512
        %v858 = vsel %vm857, %v852, 0
        %v860 = vsel %vm857, %v856, 0
        %862 = vmatpush.xpose.msra.mxu0 0.0
        %863 = vmatpush.xpose.msra.mxu0 0.0
        %864 = vmatpush.xpose.msra.mxu0 0.0
        %865 = vmatpush.xpose.msra.mxu0 0.0
        %866 = vmatpush.xpose.msra.mxu0 0.0
        %867 = vmatpush.xpose.msra.mxu0 0.0
        %868 = vmatpush.xpose.msra.mxu0 0.0
        %869 = vmatpush.xpose.msra.mxu0 0.0
        %870 = vmatpush.xpose.msra.mxu0 0.0
        %871 = vmatpush.xpose.msra.mxu0 0.0
        %872 = vmatpush.xpose.msra.mxu0 0.0
        %873 = vmatpush.xpose.msra.mxu0 0.0
        %874 = vmatpush.xpose.msra.mxu0 0.0
        %875 = vmatpush.xpose.msra.mxu0 0.0
        %876 = vmatpush.xpose.msra.mxu0 0.0
        %877 = vmatpush.xpose.msra.mxu0 %v860
        %878 = vmatmul.f32.gmra.mxu0 %v858
        %v879 = vpop.f32.mrf.mxu0
        %v880 = vadd.f32 0.0, %v879
        %881 = vdwg.mxu0
        %v882 = vsel %vm857, %v880, -inf
        %883 = vmax.xlane.f32.xlu0 %v882
        %v884 = vpop.xlane.xlu0 %883
        %v885 = vsub.f32 %v880, %v884
        %v886 = vmul.f32 %v885, 1.442695
        %v887 = vpow.pop %v886
        %v888 = vsel %vm857, %v887, 0.0
        %889 = vadd.xlane.f32.xlu0 %v888
        %v890 = vpop.xlane.xlu0 %889
        %v891 = vrcp.pop %v890
        %v892 = vmul.f32 %v890, %v891
        %v893 = vsub.f32 1.0, %v892
        %v894 = vmul.f32 %v891, %v893
        %v895 = vadd.f32 %v891, %v894
        %vm896 = vweird.f32 %v890
        %vm897 = vweird.f32 %v891
        %vm898 = vmor %vm896, %vm897
        %v899 = vsel %vm898, %v891, %v895
        %v900 = vand.u32 2147483647, %v890
        %vm901 = vcmp.eq.f32.partialorder %v900, 8.507059e+37
        %v902 = vand.u32 %v890, 2147483648
        %v903 = vor.u32 1.1754944e-38, %v902
        %v904 = vsel %vm901, %v903, %v899
        %v905 = vmul.f32 %v887, %v904
        %906 = vrot.lane.b32.xlu0 %v852, 64
        %v907 = vpop.permute.xlu0 %906
        %v910 = vsel %vm857, %v905, 0
        %912 = vmatpush.msra.mxu0 0.0
        %913 = vmatpush.msra.mxu0 0.0
        %914 = vmatpush.msra.mxu0 0.0
        %915 = vmatpush.msra.mxu0 0.0
        %916 = vmatpush.msra.mxu0 0.0
        %917 = vmatpush.msra.mxu0 0.0
        %918 = vmatpush.msra.mxu0 0.0
        %919 = vmatpush.msra.mxu0 0.0
        %920 = vmatpush.msra.mxu0 0.0
        %921 = vmatpush.msra.mxu0 0.0
        %922 = vmatpush.msra.mxu0 0.0
        %923 = vmatpush.msra.mxu0 0.0
        %924 = vmatpush.msra.mxu0 0.0
        %925 = vmatpush.msra.mxu0 0.0
        %926 = vmatpush.msra.mxu0 0.0
        %927 = vmatpush.msra.mxu0 %v907
        %928 = vmatmul.f32.gmra.mxu0 %v910
        %v929 = vpop.f32.mrf.mxu0
        %v930 = vadd.f32 0.0, %v929
        %931 = vdwg.mxu0
        %932 = vrot.lane.b32.xlu0 %v852, 120
        %v933 = vpop.permute.xlu0 %932
        %934 = vrot.lane.b32.xlu0 %v852, 88
        %v935 = vpop.permute.xlu0 %934
        %v936 = vsel %vm857, %v933, 0
        %v938 = vsel %vm857, %v935, 0
        %940 = vmatpush.xpose.msra.mxu0 0.0
        %941 = vmatpush.xpose.msra.mxu0 0.0
        %942 = vmatpush.xpose.msra.mxu0 0.0
        %943 = vmatpush.xpose.msra.mxu0 0.0
        %944 = vmatpush.xpose.msra.mxu0 0.0
        %945 = vmatpush.xpose.msra.mxu0 0.0
        %946 = vmatpush.xpose.msra.mxu0 0.0
        %947 = vmatpush.xpose.msra.mxu0 0.0
        %948 = vmatpush.xpose.msra.mxu0 0.0
        %949 = vmatpush.xpose.msra.mxu0 0.0
        %950 = vmatpush.xpose.msra.mxu0 0.0
        %951 = vmatpush.xpose.msra.mxu0 0.0
        %952 = vmatpush.xpose.msra.mxu0 0.0
        %953 = vmatpush.xpose.msra.mxu0 0.0
        %954 = vmatpush.xpose.msra.mxu0 0.0
        %955 = vmatpush.xpose.msra.mxu0 %v938
        %956 = vmatmul.f32.gmra.mxu0 %v936
        %v957 = vpop.f32.mrf.mxu0
        %v958 = vadd.f32 0.0, %v957
        %959 = vdwg.mxu0
        %v960 = vsel %vm857, %v958, -inf
        %961 = vmax.xlane.f32.xlu0 %v960
        %v962 = vpop.xlane.xlu0 %961
        %v963 = vsub.f32 %v958, %v962
        %v964 = vmul.f32 %v963, 1.442695
        %v965 = vpow.pop %v964
        %v966 = vsel %vm857, %v965, 0.0
        %967 = vadd.xlane.f32.xlu0 %v966
        %v968 = vpop.xlane.xlu0 %967
        %v969 = vrcp.pop %v968
        %v970 = vmul.f32 %v968, %v969
        %v971 = vsub.f32 1.0, %v970
        %v972 = vmul.f32 %v969, %v971
        %v973 = vadd.f32 %v969, %v972
        %vm974 = vweird.f32 %v968
        %vm975 = vweird.f32 %v969
        %vm976 = vmor %vm974, %vm975
        %v977 = vsel %vm976, %v969, %v973
        %v978 = vand.u32 2147483647, %v968
        %vm979 = vcmp.eq.f32.partialorder %v978, 8.507059e+37
        %v980 = vand.u32 %v968, 2147483648
        %v981 = vor.u32 1.1754944e-38, %v980
        %v982 = vsel %vm979, %v981, %v977
        %v983 = vmul.f32 %v965, %v982
        %984 = vrot.lane.b32.xlu0 %v852, 56
        %v985 = vpop.permute.xlu0 %984
        %v988 = vsel %vm857, %v983, 0
        %990 = vmatpush.msra.mxu0 0.0
        %991 = vmatpush.msra.mxu0 0.0
        %992 = vmatpush.msra.mxu0 0.0
        %993 = vmatpush.msra.mxu0 0.0
        %994 = vmatpush.msra.mxu0 0.0
        %995 = vmatpush.msra.mxu0 0.0
        %996 = vmatpush.msra.mxu0 0.0
        %997 = vmatpush.msra.mxu0 0.0
        %998 = vmatpush.msra.mxu0 0.0
        %999 = vmatpush.msra.mxu0 0.0
        %1000 = vmatpush.msra.mxu0 0.0
        %1001 = vmatpush.msra.mxu0 0.0
        %1002 = vmatpush.msra.mxu0 0.0
        %1003 = vmatpush.msra.mxu0 0.0
        %1004 = vmatpush.msra.mxu0 0.0
        %1005 = vmatpush.msra.mxu0 %v985
        %1006 = vmatmul.f32.gmra.mxu0 %v988
        %v1007 = vpop.f32.mrf.mxu0
        %v1008 = vadd.f32 0.0, %v1007
        %1009 = vdwg.mxu0
        %1010 = vrot.lane.b32.xlu0 %v852, 112
        %v1011 = vpop.permute.xlu0 %1010
        %1012 = vrot.lane.b32.xlu0 %v852, 80
        %v1013 = vpop.permute.xlu0 %1012
        %v1014 = vsel %vm857, %v1011, 0
        %v1016 = vsel %vm857, %v1013, 0
        %1018 = vmatpush.xpose.msra.mxu0 0.0
        %1019 = vmatpush.xpose.msra.mxu0 0.0
        %1020 = vmatpush.xpose.msra.mxu0 0.0
        %1021 = vmatpush.xpose.msra.mxu0 0.0
        %1022 = vmatpush.xpose.msra.mxu0 0.0
        %1023 = vmatpush.xpose.msra.mxu0 0.0
        %1024 = vmatpush.xpose.msra.mxu0 0.0
        %1025 = vmatpush.xpose.msra.mxu0 0.0
        %1026 = vmatpush.xpose.msra.mxu0 0.0
        %1027 = vmatpush.xpose.msra.mxu0 0.0
        %1028 = vmatpush.xpose.msra.mxu0 0.0
        %1029 = vmatpush.xpose.msra.mxu0 0.0
        %1030 = vmatpush.xpose.msra.mxu0 0.0
        %1031 = vmatpush.xpose.msra.mxu0 0.0
        %1032 = vmatpush.xpose.msra.mxu0 0.0
        %1033 = vmatpush.xpose.msra.mxu0 %v1016
        %1034 = vmatmul.f32.gmra.mxu0 %v1014
        %v1035 = vpop.f32.mrf.mxu0
        %v1036 = vadd.f32 0.0, %v1035
        %1037 = vdwg.mxu0
        %v1038 = vsel %vm857, %v1036, -inf
        %1039 = vmax.xlane.f32.xlu0 %v1038
        %v1040 = vpop.xlane.xlu0 %1039
        %v1041 = vsub.f32 %v1036, %v1040
        %v1042 = vmul.f32 %v1041, 1.442695
        %v1043 = vpow.pop %v1042
        %v1044 = vsel %vm857, %v1043, 0.0
        %1045 = vadd.xlane.f32.xlu0 %v1044
        %v1046 = vpop.xlane.xlu0 %1045
        %v1047 = vrcp.pop %v1046
        %v1048 = vmul.f32 %v1046, %v1047
        %v1049 = vsub.f32 1.0, %v1048
        %v1050 = vmul.f32 %v1047, %v1049
        %v1051 = vadd.f32 %v1047, %v1050
        %vm1052 = vweird.f32 %v1046
        %vm1053 = vweird.f32 %v1047
        %vm1054 = vmor %vm1052, %vm1053
        %v1055 = vsel %vm1054, %v1047, %v1051
        %v1056 = vand.u32 2147483647, %v1046
        %vm1057 = vcmp.eq.f32.partialorder %v1056, 8.507059e+37
        %v1058 = vand.u32 %v1046, 2147483648
        %v1059 = vor.u32 1.1754944e-38, %v1058
        %v1060 = vsel %vm1057, %v1059, %v1055
        %v1061 = vmul.f32 %v1043, %v1060
        %1062 = vrot.lane.b32.xlu0 %v852, 48
        %v1063 = vpop.permute.xlu0 %1062
        %v1066 = vsel %vm857, %v1061, 0
        %1068 = vmatpush.msra.mxu0 0.0
        %1069 = vmatpush.msra.mxu0 0.0
        %1070 = vmatpush.msra.mxu0 0.0
        %1071 = vmatpush.msra.mxu0 0.0
        %1072 = vmatpush.msra.mxu0 0.0
        %1073 = vmatpush.msra.mxu0 0.0
        %1074 = vmatpush.msra.mxu0 0.0
        %1075 = vmatpush.msra.mxu0 0.0
        %1076 = vmatpush.msra.mxu0 0.0
        %1077 = vmatpush.msra.mxu0 0.0
        %1078 = vmatpush.msra.mxu0 0.0
        %1079 = vmatpush.msra.mxu0 0.0
        %1080 = vmatpush.msra.mxu0 0.0
        %1081 = vmatpush.msra.mxu0 0.0
        %1082 = vmatpush.msra.mxu0 0.0
        %1083 = vmatpush.msra.mxu0 %v1063
        %1084 = vmatmul.f32.gmra.mxu0 %v1066
        %v1085 = vpop.f32.mrf.mxu0
        %v1086 = vadd.f32 0.0, %v1085
        %1087 = vdwg.mxu0
        %1088 = vrot.lane.b32.xlu0 %v852, 104
        %v1089 = vpop.permute.xlu0 %1088
        %1090 = vrot.lane.b32.xlu0 %v852, 72
        %v1091 = vpop.permute.xlu0 %1090
        %v1092 = vsel %vm857, %v1089, 0
        %v1094 = vsel %vm857, %v1091, 0
        %1096 = vmatpush.xpose.msra.mxu0 0.0
        %1097 = vmatpush.xpose.msra.mxu0 0.0
        %1098 = vmatpush.xpose.msra.mxu0 0.0
        %1099 = vmatpush.xpose.msra.mxu0 0.0
        %1100 = vmatpush.xpose.msra.mxu0 0.0
        %1101 = vmatpush.xpose.msra.mxu0 0.0
        %1102 = vmatpush.xpose.msra.mxu0 0.0
        %1103 = vmatpush.xpose.msra.mxu0 0.0
        %1104 = vmatpush.xpose.msra.mxu0 0.0
        %1105 = vmatpush.xpose.msra.mxu0 0.0
        %1106 = vmatpush.xpose.msra.mxu0 0.0
        %1107 = vmatpush.xpose.msra.mxu0 0.0
        %1108 = vmatpush.xpose.msra.mxu0 0.0
        %1109 = vmatpush.xpose.msra.mxu0 0.0
        %1110 = vmatpush.xpose.msra.mxu0 0.0
        %1111 = vmatpush.xpose.msra.mxu0 %v1094
        %1112 = vmatmul.f32.gmra.mxu0 %v1092
        %v1113 = vpop.f32.mrf.mxu0
        %v1114 = vadd.f32 0.0, %v1113
        %1115 = vdwg.mxu0
        %v1116 = vsel %vm857, %v1114, -inf
        %1117 = vmax.xlane.f32.xlu0 %v1116
        %v1118 = vpop.xlane.xlu0 %1117
        %v1119 = vsub.f32 %v1114, %v1118
        %v1120 = vmul.f32 %v1119, 1.442695
        %v1121 = vpow.pop %v1120
        %v1122 = vsel %vm857, %v1121, 0.0
        %1123 = vadd.xlane.f32.xlu0 %v1122
        %v1124 = vpop.xlane.xlu0 %1123
        %v1125 = vrcp.pop %v1124
        %v1126 = vmul.f32 %v1124, %v1125
        %v1127 = vsub.f32 1.0, %v1126
        %v1128 = vmul.f32 %v1125, %v1127
        %v1129 = vadd.f32 %v1125, %v1128
        %vm1130 = vweird.f32 %v1124
        %vm1131 = vweird.f32 %v1125
        %vm1132 = vmor %vm1130, %vm1131
        %v1133 = vsel %vm1132, %v1125, %v1129
        %v1134 = vand.u32 2147483647, %v1124
        %vm1135 = vcmp.eq.f32.partialorder %v1134, 8.507059e+37
        %v1136 = vand.u32 %v1124, 2147483648
        %v1137 = vor.u32 1.1754944e-38, %v1136
        %v1138 = vsel %vm1135, %v1137, %v1133
        %v1139 = vmul.f32 %v1121, %v1138
        %1140 = vrot.lane.b32.xlu0 %v852, 40
        %v1141 = vpop.permute.xlu0 %1140
        %v1144 = vsel %vm857, %v1139, 0
        %1146 = vmatpush.msra.mxu0 0.0
        %1147 = vmatpush.msra.mxu0 0.0
        %1148 = vmatpush.msra.mxu0 0.0
        %1149 = vmatpush.msra.mxu0 0.0
        %1150 = vmatpush.msra.mxu0 0.0
        %1151 = vmatpush.msra.mxu0 0.0
        %1152 = vmatpush.msra.mxu0 0.0
        %1153 = vmatpush.msra.mxu0 0.0
        %1154 = vmatpush.msra.mxu0 0.0
        %1155 = vmatpush.msra.mxu0 0.0
        %1156 = vmatpush.msra.mxu0 0.0
        %1157 = vmatpush.msra.mxu0 0.0
        %1158 = vmatpush.msra.mxu0 0.0
        %1159 = vmatpush.msra.mxu0 0.0
        %1160 = vmatpush.msra.mxu0 0.0
        %1161 = vmatpush.msra.mxu0 %v1141
        %1162 = vmatmul.f32.gmra.mxu0 %v1144
        %v1163 = vpop.f32.mrf.mxu0
        %v1164 = vadd.f32 0.0, %v1163
        %1165 = vdwg.mxu0
        %1167 = vrot.lane.b32.xlu0 %v1008, 8
        %v1168 = vpop.permute.xlu0 %1167
        %1171 = vrot.lane.b32.xlu0 %v1086, 16
        %v1172 = vpop.permute.xlu0 %1171
        %1175 = vrot.lane.b32.xlu0 %v1164, 24
        %v1176 = vpop.permute.xlu0 %1175
        %v1178 = vsel %vm857, %v930, %v1168
        %vm1179 = vcmask 130048
        %v1180 = vsel %vm1179, %v1178, %v1172
        %vm1181 = vcmask 195584
        %v1182 = vsel %vm1181, %v1180, %v1176
        %v1183 = vld [vmem:[%s789] sm:$0xff]
        %v1184 = vld [vmem:[%s789 + $0x8] sm:$0xff]
        %v1185 = vld [vmem:[%s789 + $0x10] sm:$0xff]
        %v1186 = vld [vmem:[%s789 + $0x18] sm:$0xff]
        %v1187 = vld [vmem:[%s662] sm:$0x1]
        %v1189 = vperm.slane %v1187, 0
        %v1192 = vsel %vm830, %v1182, 0
        %1194 = vmatpush.msra.mxu0 0.0
        %1195 = vmatpush.msra.mxu0 0.0
        %1196 = vmatpush.msra.mxu0 0.0
        %1197 = vmatpush.msra.mxu0 0.0
        %1198 = vmatpush.msra.mxu0 0.0
        %1199 = vmatpush.msra.mxu0 0.0
        %1200 = vmatpush.msra.mxu0 0.0
        %1201 = vmatpush.msra.mxu0 0.0
        %1202 = vmatpush.msra.mxu0 0.0
        %1203 = vmatpush.msra.mxu0 0.0
        %1204 = vmatpush.msra.mxu0 0.0
        %1205 = vmatpush.msra.mxu0 0.0
        %1206 = vmatpush.msra.mxu0 %v1186
        %1207 = vmatpush.msra.mxu0 %v1185
        %1208 = vmatpush.msra.mxu0 %v1184
        %1209 = vmatpush.msra.mxu0 %v1183
        %1210 = vmatmul.f32.gmra.mxu0 %v1192
        %v1211 = vpop.f32.mrf.mxu0
        %v1212 = vadd.f32 %v1189, %v1211
        %1213 = vdwg.mxu0
        %v1214 = vadd.f32 %v821, %v1212
        %v1215 = vsel %vm830, %v1214, 0.0
        %1216 = vadd.xlane.f32.xlu0 %v1215
        %v1217 = vpop.xlane.xlu0 %1216
        %v1218 = vrcp.pop 32.0
        %v1219 = vmul.f32 32.0, %v1218
        %v1220 = vsub.f32 1.0, %v1219
        %v1221 = vmul.f32 %v1218, %v1220
        %v1222 = vadd.f32 %v1218, %v1221
        %vm1223 = vweird.f32 %v1218
        %v1224 = vsel %vm1223, %v1218, %v1222
        %v1225 = vmul.f32 %v1217, %v1224
        %v1226 = vsub.f32 %v1214, %v1225
        %v1227 = vmul.f32 %v1226, %v1226
        %v1228 = vsel %vm830, %v1227, 0.0
        %1229 = vadd.xlane.f32.xlu0 %v1228
        %v1230 = vpop.xlane.xlu0 %1229
        %v1231 = vmul.f32 %v1230, %v1224
        %v1232 = vadd.f32 %v1231, 1e-05
        %v1233 = vrsqrt.pop %v1232
        %v1234 = vmul.f32 %v1233, %v1232
        %v1235 = vmul.f32 %v1234, %v1233
        %v1236 = vmul.f32 0.5, %v1235
        %v1237 = vsub.f32 1.5, %v1236
        %v1238 = vmul.f32 %v1233, %v1237
        %vm1239 = vweird.f32 %v1232
        %vm1240 = vweird.f32 %v1233
        %vm1241 = vmor %vm1239, %vm1240
        %v1242 = vsel %vm1241, %v1233, %v1238
        %v1243 = vmul.f32 %v1226, %v1242
        %v1244 = vld [vmem:[%s792] sm:$0x1]
        %v1246 = vperm.slane %v1244, 0
        %v1248 = vmul.f32 %v1243, %v1246
        %v1249 = vld [vmem:[%s671] sm:$0x1]
        %v1251 = vperm.slane %v1249, 0
        %v1253 = vadd.f32 %v1248, %v1251
        %v1254 = vld [vmem:[%s797] sm:$0xff]
        %v1255 = vld [vmem:[%s797 + $0x8] sm:$0xff]
        %v1256 = vld [vmem:[%s797 + $0x10] sm:$0xff]
        %v1257 = vld [vmem:[%s797 + $0x18] sm:$0xff]
        %v1258 = vld [vmem:[%s800] sm:$0x1]
        %v1260 = vperm.slane %v1258, 0
        %v1263 = vsel %vm830, %v1253, 0
        %1265 = vmatpush.msra.mxu0 0.0
        %1266 = vmatpush.msra.mxu0 0.0
        %1267 = vmatpush.msra.mxu0 0.0
        %1268 = vmatpush.msra.mxu0 0.0
        %1269 = vmatpush.msra.mxu0 0.0
        %1270 = vmatpush.msra.mxu0 0.0
        %1271 = vmatpush.msra.mxu0 0.0
        %1272 = vmatpush.msra.mxu0 0.0
        %1273 = vmatpush.msra.mxu0 0.0
        %1274 = vmatpush.msra.mxu0 0.0
        %1275 = vmatpush.msra.mxu0 0.0
        %1276 = vmatpush.msra.mxu0 0.0
        %1277 = vmatpush.msra.mxu0 %v1257
        %1278 = vmatpush.msra.mxu0 %v1256
        %1279 = vmatpush.msra.mxu0 %v1255
        %1280 = vmatpush.msra.mxu0 %v1254
        %1281 = vmatmul.f32.gmra.mxu0 %v1263
        %v1282 = vpop.f32.mrf.mxu0
        %v1283 = vadd.f32 %v1260, %v1282
        %1284 = vdwg.mxu0
        %v1285 = vmax.f32 %v1283, 0.0
        %v1286 = vld [vmem:[%s805] sm:$0xff]
        %v1287 = vld [vmem:[%s805 + $0x8] sm:$0xff]
        %v1288 = vld [vmem:[%s805 + $0x10] sm:$0xff]
        %v1289 = vld [vmem:[%s805 + $0x18] sm:$0xff]
        %v1290 = vld [vmem:[%s805 + $0x20] sm:$0xff]
        %v1291 = vld [vmem:[%s805 + $0x28] sm:$0xff]
        %v1292 = vld [vmem:[%s805 + $0x30] sm:$0xff]
        %v1293 = vld [vmem:[%s805 + $0x38] sm:$0xff]
        %v1294 = vld [vmem:[%s808] sm:$0x1]
        %v1296 = vperm.slane %v1294, 0
        %vm1298 = vcmask 523264
        %v1300 = vsel %vm1298, %v1285, 0
        %1302 = vmatpush.msra.mxu0 0.0
        %1303 = vmatpush.msra.mxu0 0.0
        %1304 = vmatpush.msra.mxu0 0.0
        %1305 = vmatpush.msra.mxu0 0.0
        %1306 = vmatpush.msra.mxu0 0.0
        %1307 = vmatpush.msra.mxu0 0.0
        %1308 = vmatpush.msra.mxu0 0.0
        %1309 = vmatpush.msra.mxu0 0.0
        %1310 = vmatpush.msra.mxu0 %v1293
        %1311 = vmatpush.msra.mxu0 %v1292
        %1312 = vmatpush.msra.mxu0 %v1291
        %1313 = vmatpush.msra.mxu0 %v1290
        %1314 = vmatpush.msra.mxu0 %v1289
        %1315 = vmatpush.msra.mxu0 %v1288
        %1316 = vmatpush.msra.mxu0 %v1287
        %1317 = vmatpush.msra.mxu0 %v1286
        %1318 = vmatmul.f32.gmra.mxu0 %v1300
        %v1319 = vpop.f32.mrf.mxu0
        %v1320 = vadd.f32 %v1296, %v1319
        %1321 = vdwg.mxu0
        %v1322 = vadd.f32 %v1253, %v1320
        %v1323 = vsel %vm830, %v1322, 0.0
        %1324 = vadd.xlane.f32.xlu0 %v1323
        %v1325 = vpop.xlane.xlu0 %1324
        %v1326 = vmul.f32 %v1325, %v1224
        %v1327 = vsub.f32 %v1322, %v1326
        %v1328 = vmul.f32 %v1327, %v1327
        %v1329 = vsel %vm830, %v1328, 0.0
        %1330 = vadd.xlane.f32.xlu0 %v1329
        %v1331 = vpop.xlane.xlu0 %1330
        %v1332 = vmul.f32 %v1331, %v1224
        %v1333 = vadd.f32 %v1332, 1e-05
        %v1334 = vrsqrt.pop %v1333
        %v1335 = vmul.f32 %v1334, %v1333
        %v1336 = vmul.f32 %v1335, %v1334
        %v1337 = vmul.f32 0.5, %v1336
        %v1338 = vsub.f32 1.5, %v1337
        %v1339 = vmul.f32 %v1334, %v1338
        %vm1340 = vweird.f32 %v1333
        %vm1341 = vweird.f32 %v1334
        %vm1342 = vmor %vm1340, %vm1341
        %v1343 = vsel %vm1342, %v1334, %v1339
        %v1344 = vmul.f32 %v1327, %v1343
        %v1345 = vld [vmem:[%s811] sm:$0x1]
        %v1347 = vperm.slane %v1345, 0
        %v1349 = vmul.f32 %v1344, %v1347
        %v1350 = vld [vmem:[%s680] sm:$0x1]
        %v1352 = vperm.slane %v1350, 0
        %v1354 = vadd.f32 %v1349, %v1352
        %1355 = vst.msk [vmem:[#allocation2] sm:$0xff] %vm830, %v1354
        %p1356 = scmp.eq.s32.totalorder %s39, 1
        // Predicated region
        $region109: #{tpu_custom_call.1} parent=83 // pred_check
          %p1357 = pneg %p1356
        $region110: #{tpu_custom_call.1} parent=83 // pred_check_branch
          %1359 = sbr.rel (%p1357) target = $region112
        $region111: #{tpu_custom_call.1} parent=83 // pred_region
          %v1360 = vld [vmem:[#allocation2] sm:$0xff]
          %v1361 = vsel %vm830, %v1360, 0.0
          %1362 = vadd.xlane.f32.xlu0 %v1361
          %v1363 = vpop.xlane.xlu0 %1362
          %v1364 = vmul.f32 %v1363, %v1224
          %v1365 = vsub.f32 %v1360, %v1364
          %v1366 = vmul.f32 %v1365, %v1365
          %v1367 = vsel %vm830, %v1366, 0.0
          %1368 = vadd.xlane.f32.xlu0 %v1367
          %v1369 = vpop.xlane.xlu0 %1368
          %v1370 = vmul.f32 %v1369, %v1224
          %v1371 = vadd.f32 %v1370, 1e-05
          %v1372 = vrsqrt.pop %v1371
          %v1373 = vmul.f32 %v1372, %v1371
          %v1374 = vmul.f32 %v1373, %v1372
          %v1375 = vmul.f32 0.5, %v1374
          %v1376 = vsub.f32 1.5, %v1375
          %v1377 = vmul.f32 %v1372, %v1376
          %vm1378 = vweird.f32 %v1371
          %vm1379 = vweird.f32 %v1372
          %vm1380 = vmor %vm1378, %vm1379
          %v1381 = vsel %vm1380, %v1372, %v1377
          %v1382 = vmul.f32 %v1365, %v1381
          %v1383 = vld [vmem:[%s14] sm:$0x1]
          %v1385 = vperm.slane %v1383, 0
          %v1387 = vmul.f32 %v1382, %v1385
          %v1388 = vld [vmem:[%s15] sm:$0x1]
          %v1390 = vperm.slane %v1388, 0
          %v1392 = vadd.f32 %v1387, %v1390
          %1393 = vst.msk [vmem:[%s776] sm:$0xff] %vm830, %v1392
        $region112: #{tpu_custom_call.1} parent=83 // pred_fallthru
          _
        %s1394 = sand.u32 %s455, 1
        %s1395 = scalar_lea.sflag [#allocation5], %s1394
        %s1396 = sand.u32 %s455, 1
        %s1397 = smul.addr %s1396, 8
        %s1398 = scalar_lea.vmem [#allocation11], %s1397
        // Predicated region
        $region113: #{tpu_custom_call.1} parent=83 // pred_check
          %p1399 = pneg %p465
        $region114: #{tpu_custom_call.1} parent=83 // pred_check_branch
          %1401 = sbr.rel (%p1399) target = $region116
        $region115: #{tpu_custom_call.1} parent=83 // pred_region
          %1403 = vsyncadd %s1395, 0
          %s1404 = smul.addr %s38, 8
          %s1405 = scalar_lea.hbm %s16, %s1404
          %s1407 = sshll.u32 %s1398, 4
          %s1408 = int_to_ptr.vmem [resolvable:$true] %s1407
          %s1409 = sshll.u32 %s1405, 4
          %s1410 = int_to_ptr.hbm [resolvable:$true] %s1409
          %1412 = dma.vmem_to_hbm [thread:$0]  %s1408, 128, %s1410, %s1395
        $region116: #{tpu_custom_call.1} parent=83 // pred_fallthru
          _
      $region84: #{tpu_custom_call.1} parent=5 // pred_fallthru
        _
      %p1413 = scmp.le.s32.totalorder 2, %s29
      // Predicated region
      $region117: #{tpu_custom_call.1} parent=5 // pred_check
        %p1414 = pneg %p1413
      $region118: #{tpu_custom_call.1} parent=5 // pred_check_branch
        %1416 = sbr.rel (%p1414) target = $region120
      $region119: #{tpu_custom_call.1} parent=5 // pred_region
        %s1417 = ssub.s32 %s29, 2
        // Predicated region
        $region121: #{tpu_custom_call.1} parent=119 // pred_check
          %p1418 = pneg %p471
        $region122: #{tpu_custom_call.1} parent=119 // pred_check_branch
          %1420 = sbr.rel (%p1418) target = $region124
        $region123: #{tpu_custom_call.1} parent=119 // pred_region
          %s1421 = sand.u32 %s456, 1
          %s1422 = scalar_lea.sflag [#allocation5], %s1421
          %s1423 = sand.u32 %s456, 1
          %s1424 = smul.addr %s1423, 8
          %s1425 = scalar_lea.vmem [#allocation11], %s1424
          %1427 = dma.done %s1422, 128
        $region124: #{tpu_custom_call.1} parent=119 // pred_fallthru
          _
      $region120: #{tpu_custom_call.1} parent=5 // pred_fallthru
        _
    $region6: #{tpu_custom_call.1} parent=1 // loop_footer
      %s33 = sadd.s32 1, %s29
    $region7: #{tpu_custom_call.1} parent=1 // loop_footer_branch
      %28 = sbr.rel target = $region3
    $region8: #{tpu_custom_call.1} parent=1 // loop_exit
      _
    %1428 = vsyncpa [#allocation4], 1
    %s1429 = scalar_lea.sflag [#allocation4], 1
    %1430 = vsyncpa %s1429, 1
    %1431 = vsyncpa [#allocation7], 1
    %1432 = vsyncpa [#allocation5], 1
    %s1433 = scalar_lea.sflag [#allocation5], 1
    %1434 = vsyncpa %s1433, 1

</llo_original>
